<compile_context>
chip_gen: v5e
topology: v5e:2x2
jax: 0.10.0
libtpu: 0.0.40
codegen_flags: <defaults>
</compile_context>

<pallas_src>
import functools

import jax
import jax.numpy as jnp
from jax.experimental import pallas as pl
from jax.experimental.pallas import tpu as pltpu


def _round_up(x, m):
    return ((x + m - 1) // m) * m


def _choose_tile(P, C_in, bytes_per_elem, halo):
    """Lane tile for the flattened padded-pixel axis.

    Multiple of 128; input block (C_in, tile + halo) capped at ~2 MiB so the
    double-buffered pipeline fits default scoped VMEM on v5e/v6e/v7x; at least
    two grid steps whenever possible (feeds both v7x TensorCores)."""
    cap_lanes = (2 << 20) // (C_in * bytes_per_elem)
    cap = max(128, ((cap_lanes - halo) // 128) * 128)
    full = _round_up(P, 128)
    tile = min(cap, full)
    if tile >= full and P > 128:
        tile = max(128, _round_up(pl.cdiv(P, 2), 128))
    return tile


def _make_kernel(shifts, tile):
    """shifts: 9 static lane offsets (dy*(W+2)+dx); tile: output lanes per step."""

    def kernel(xb_ref, w1_ref, b1_ref, w2_ref, b2_ref, o_ref):
        # xb_ref: (C_in, tile + halo)  padded-pixel block + halo, lane-dense
        # w1_ref: (9, C_mid, C_in)     3x3 weights, one (C_mid, C_in) slab per tap
        # b1_ref: (C_mid, 1), w2_ref: (C_mid, 1), b2_ref: (1, 1)   (f32)
        # o_ref : (1, tile)
        acc = None
        for k, s in enumerate(shifts):
            # Static lane-offset slice == k-th 3x3 tap for every output pixel.
            patch = xb_ref[:, s:s + tile]
            part = jnp.dot(w1_ref[k], patch, preferred_element_type=jnp.float32)
            acc = part if acc is None else acc + part
        hidden = jnp.maximum(acc + b1_ref[...], 0.0)              # bias + ReLU (VPU)
        # 1x1 conv with a single output channel: broadcast-mul + sublane reduce,
        # not a degenerate N=1 MXU matmul.
        logit = jnp.sum(hidden * w2_ref[...], axis=0, keepdims=True) + b2_ref[...]
        o_ref[...] = jax.nn.sigmoid(logit).astype(o_ref.dtype)    # EUP

    return kernel


def proj_layers_forward(x_nchw, w1_oihw, b1, w2_oihw, b2,
                        compute_dtype=jnp.bfloat16):
    """Forward pass matching PyTorch ProjLayers.forward. Returns NCHW (B,1,H,W)."""
    B, C_in, H, W = x_nchw.shape
    C_mid = w1_oihw.shape[0]
    Hp, Wp = H + 2, W + 2
    P = B * Hp * Wp                      # flattened padded-pixel extent (lanes)
    halo = _round_up(2 * Wp + 2, 128)    # max tap offset, rounded to lane tile

    # --- wrapper-side layout plumbing (one read/write of x; NO im2col) -------
    x = jnp.transpose(x_nchw.astype(jnp.float32), (1, 0, 2, 3))     # (C_in,B,H,W)
    x_pad = jnp.pad(x, ((0, 0), (0, 0), (1, 1), (1, 1)))            # (C_in,B,Hp,Wp)
    x_flat = x_pad.reshape(C_in, P).astype(compute_dtype)           # pixels on lanes

    bpe = jnp.dtype(compute_dtype).itemsize
    tile = _choose_tile(P, C_in, bpe, halo)
    G = pl.cdiv(P, tile)
    tw = tile + halo
    # Zero-extend so every (tile + halo) window is in range; valid output pixels
    # never read the extension (their last needed index is P - 1).
    l_ext = G * tile + halo
    x_ext = jnp.pad(x_flat, ((0, 0), (0, l_ext - P)))
    # Overlapping (tile + halo) windows laid out contiguously so a plain
    # BlockSpec pipeline (auto double-buffering) can stream them.
    x_blocked = jnp.concatenate(
        [x_ext[:, g * tile: g * tile + tw] for g in range(G)], axis=1)

    # Weights: one (C_mid, C_in) slab per tap; tiny constants stay f32.
    w1_k = jnp.transpose(w1_oihw, (2, 3, 0, 1)).reshape(9, C_mid, C_in)
    w1_k = w1_k.astype(compute_dtype)
    b1_col = b1.reshape(C_mid, 1).astype(jnp.float32)
    w2_col = w2_oihw[0, :, 0, 0].reshape(C_mid, 1).astype(jnp.float32)
    b2_2d = b2.reshape(1, 1).astype(jnp.float32)

    shifts = [dy * Wp + dx for dy in range(3) for dx in range(3)]
    kernel = _make_kernel(shifts, tile)

    flops = 2 * 9 * C_mid * C_in * G * tile + 4 * C_mid * G * tile
    bytes_accessed = (C_in * G * tw + 9 * C_mid * C_in) * bpe \
        + 4 * (2 * C_mid + 1 + G * tile)

    out_flat = pl.pallas_call(
        kernel,
        out_shape=jax.ShapeDtypeStruct((1, G * tile), jnp.float32),
        grid_spec=pltpu.PrefetchScalarGridSpec(
            num_scalar_prefetch=0,
            grid=(G,),
            in_specs=[
                pl.BlockSpec((C_in, tw), lambda g: (0, g)),
                pl.BlockSpec((9, C_mid, C_in), lambda g: (0, 0, 0)),
                pl.BlockSpec((C_mid, 1), lambda g: (0, 0)),
                pl.BlockSpec((C_mid, 1), lambda g: (0, 0)),
                pl.BlockSpec((1, 1), lambda g: (0, 0)),
            ],
            out_specs=pl.BlockSpec((1, tile), lambda g: (0, g)),
        ),
        compiler_params=pltpu.CompilerParams(
            dimension_semantics=("parallel",),
        ),
        cost_estimate=pl.CostEstimate(
            flops=int(flops),
            transcendentals=int(G * tile),
            bytes_accessed=int(bytes_accessed),
        ),
    )(x_blocked, w1_k, b1_col, w2_col, b2_2d)

    # Strip padded rows/cols: p = b*Hp*Wp + y*Wp + x, valid for y < H, x < W.
    out_pad = out_flat[0, :P].reshape(B, Hp, Wp)
    return out_pad[:, :H, :W][:, None, :, :]


def _reference_forward(x_nchw, w1_oihw, b1, w2_oihw, b2):
    """Pure-JAX reference (lax conv) for correctness checking."""
    x = jnp.transpose(x_nchw, (0, 2, 3, 1)).astype(jnp.float32)       # NHWC
    w1 = jnp.transpose(w1_oihw, (2, 3, 1, 0)).astype(jnp.float32)     # HWIO
    w2 = jnp.transpose(w2_oihw, (2, 3, 1, 0)).astype(jnp.float32)     # HWIO
    y = jax.lax.conv_general_dilated(
        x, w1, window_strides=(1, 1), padding="SAME",
        dimension_numbers=("NHWC", "HWIO", "NHWC"))
    y = jnp.maximum(y + b1.reshape(1, 1, 1, -1), 0.0)
    z = jax.lax.conv_general_dilated(
        y, w2, window_strides=(1, 1), padding="VALID",
        dimension_numbers=("NHWC", "HWIO", "NHWC"))
    z = jax.nn.sigmoid(z + b2.reshape(1, 1, 1, -1))
    return jnp.transpose(z, (0, 3, 1, 2))                             # NCHW


if __name__ == "__main__":
    # Small shapes consistent with the module (in_channel must be divisible by 4).
    B, C_in, H, W = 2, 32, 16, 16
    C_mid = C_in // 4  # 8

    key = jax.random.PRNGKey(0)
    k_x, k_w1, k_b1, k_w2, k_b2 = jax.random.split(key, 5)

    x = jax.random.normal(k_x, (B, C_in, H, W), dtype=jnp.float32)

    # PyTorch-shaped parameters: OIHW weights, (O,) biases.
    w1 = 0.05 * jax.random.normal(k_w1, (C_mid, C_in, 3, 3), dtype=jnp.float32)
    b1 = 0.05 * jax.random.normal(k_b1, (C_mid,), dtype=jnp.float32)
    w2 = 0.05 * jax.random.normal(k_w2, (1, C_mid, 1, 1), dtype=jnp.float32)
    b2 = 0.05 * jax.random.normal(k_b2, (1,), dtype=jnp.float32)

    ref = jax.block_until_ready(_reference_forward(x, w1, b1, w2, b2))

    # Full-f32 path: tight tolerance against the lax.conv reference.
    fwd_f32 = jax.jit(functools.partial(proj_layers_forward,
                                        compute_dtype=jnp.float32))
    out_f32 = jax.block_until_ready(fwd_f32(x, w1, b1, w2, b2))
    assert out_f32.shape == (B, 1, H, W), out_f32.shape
    assert jnp.allclose(out_f32, ref, atol=1e-5, rtol=1e-5), \
        f"f32 max err {jnp.max(jnp.abs(out_f32 - ref))}"

    # bf16 activation/weight stream (perf default on v6e/v7x); f32 accumulation
    # and epilogue, so only a looser tolerance is needed.
    fwd_bf16 = jax.jit(functools.partial(proj_layers_forward,
                                         compute_dtype=jnp.bfloat16))
    out_bf16 = jax.block_until_ready(fwd_bf16(x, w1, b1, w2, b2))
    assert out_bf16.shape == (B, 1, H, W), out_bf16.shape
    assert jnp.allclose(out_bf16, ref, atol=2e-2, rtol=0.0), \
        f"bf16 max err {jnp.max(jnp.abs(out_bf16 - ref))}"

    print("KERNEL_OK")
</pallas_src>

<mosaic_0001>
module attributes {stable_mosaic.version = 11 : i64} {
  func.func @kernel(%arg0: i32, %arg1: memref<32x512xf32, #tpu.memory_space<vmem>>, %arg2: memref<9x8x32xf32, #tpu.memory_space<vmem>>, %arg3: memref<8x1xf32, #tpu.memory_space<vmem>>, %arg4: memref<8x1xf32, #tpu.memory_space<vmem>>, %arg5: memref<1x1xf32, #tpu.memory_space<vmem>>, %arg6: memref<1x384xf32, #tpu.memory_space<vmem>>) attributes {dimension_semantics = [#tpu.dimension_semantics<parallel>], iteration_bounds = array<i64: 2>, scalar_prefetch = 0 : i64, scratch_operands = 0 : i64, tpu.core_type = #tpu.core_type<tc>, window_params = [{transform_indices = @transform_0, window_bounds = array<i64: 32, 512>}, {pipeline_mode = #tpu.pipeline_mode<synchronous>, transform_indices = @transform_1, window_bounds = array<i64: 9, 8, 32>}, {pipeline_mode = #tpu.pipeline_mode<synchronous>, transform_indices = @transform_2, window_bounds = array<i64: 8, 1>}, {pipeline_mode = #tpu.pipeline_mode<synchronous>, transform_indices = @transform_3, window_bounds = array<i64: 8, 1>}, {pipeline_mode = #tpu.pipeline_mode<synchronous>, transform_indices = @transform_4, window_bounds = array<i64: 1, 1>}, {transform_indices = @transform_5, window_bounds = array<i64: 1, 384>}]} {
    %c0 = arith.constant 0 : index
    %c0_0 = arith.constant 0 : index
    %0 = vector.load %arg1[%c0, %c0_0] : memref<32x512xf32, #tpu.memory_space<vmem>>, vector<32x384xf32>
    %c0_1 = arith.constant 0 : index
    %c0_2 = arith.constant 0 : index
    %c0_3 = arith.constant 0 : index
    %1 = vector.load %arg2[%c0_1, %c0_2, %c0_3] : memref<9x8x32xf32, #tpu.memory_space<vmem>>, vector<1x8x32xf32>
    %2 = vector.shape_cast %1 : vector<1x8x32xf32> to vector<8x32xf32>
    %cst = arith.constant dense<0.000000e+00> : vector<8x384xf32>
    %3 = tpu.matmul %2, %0, %cst {dimension_numbers = #tpu.dot_dimension_numbers<[1], [0], [0], [1], [0, 0, 1, 1], [], []>} : vector<8x32xf32>, vector<32x384xf32>, vector<8x384xf32> -> vector<8x384xf32>
    %c0_4 = arith.constant 0 : index
    %c1 = arith.constant 1 : index
    %4 = vector.load %arg1[%c0_4, %c1] : memref<32x512xf32, #tpu.memory_space<vmem>>, vector<32x384xf32>
    %c1_5 = arith.constant 1 : index
    %c0_6 = arith.constant 0 : index
    %c0_7 = arith.constant 0 : index
    %5 = vector.load %arg2[%c1_5, %c0_6, %c0_7] : memref<9x8x32xf32, #tpu.memory_space<vmem>>, vector<1x8x32xf32>
    %6 = vector.shape_cast %5 : vector<1x8x32xf32> to vector<8x32xf32>
    %cst_8 = arith.constant dense<0.000000e+00> : vector<8x384xf32>
    %7 = tpu.matmul %6, %4, %cst_8 {dimension_numbers = #tpu.dot_dimension_numbers<[1], [0], [0], [1], [0, 0, 1, 1], [], []>} : vector<8x32xf32>, vector<32x384xf32>, vector<8x384xf32> -> vector<8x384xf32>
    %8 = arith.addf %3, %7 : vector<8x384xf32>
    %c0_9 = arith.constant 0 : index
    %c2 = arith.constant 2 : index
    %9 = vector.load %arg1[%c0_9, %c2] : memref<32x512xf32, #tpu.memory_space<vmem>>, vector<32x384xf32>
    %c2_10 = arith.constant 2 : index
    %c0_11 = arith.constant 0 : index
    %c0_12 = arith.constant 0 : index
    %10 = vector.load %arg2[%c2_10, %c0_11, %c0_12] : memref<9x8x32xf32, #tpu.memory_space<vmem>>, vector<1x8x32xf32>
    %11 = vector.shape_cast %10 : vector<1x8x32xf32> to vector<8x32xf32>
    %cst_13 = arith.constant dense<0.000000e+00> : vector<8x384xf32>
    %12 = tpu.matmul %11, %9, %cst_13 {dimension_numbers = #tpu.dot_dimension_numbers<[1], [0], [0], [1], [0, 0, 1, 1], [], []>} : vector<8x32xf32>, vector<32x384xf32>, vector<8x384xf32> -> vector<8x384xf32>
    %13 = arith.addf %8, %12 : vector<8x384xf32>
    %c0_14 = arith.constant 0 : index
    %c18 = arith.constant 18 : index
    %14 = vector.load %arg1[%c0_14, %c18] : memref<32x512xf32, #tpu.memory_space<vmem>>, vector<32x384xf32>
    %c3 = arith.constant 3 : index
    %c0_15 = arith.constant 0 : index
    %c0_16 = arith.constant 0 : index
    %15 = vector.load %arg2[%c3, %c0_15, %c0_16] : memref<9x8x32xf32, #tpu.memory_space<vmem>>, vector<1x8x32xf32>
    %16 = vector.shape_cast %15 : vector<1x8x32xf32> to vector<8x32xf32>
    %cst_17 = arith.constant dense<0.000000e+00> : vector<8x384xf32>
    %17 = tpu.matmul %16, %14, %cst_17 {dimension_numbers = #tpu.dot_dimension_numbers<[1], [0], [0], [1], [0, 0, 1, 1], [], []>} : vector<8x32xf32>, vector<32x384xf32>, vector<8x384xf32> -> vector<8x384xf32>
    %18 = arith.addf %13, %17 : vector<8x384xf32>
    %c0_18 = arith.constant 0 : index
    %c19 = arith.constant 19 : index
    %19 = vector.load %arg1[%c0_18, %c19] : memref<32x512xf32, #tpu.memory_space<vmem>>, vector<32x384xf32>
    %c4 = arith.constant 4 : index
    %c0_19 = arith.constant 0 : index
    %c0_20 = arith.constant 0 : index
    %20 = vector.load %arg2[%c4, %c0_19, %c0_20] : memref<9x8x32xf32, #tpu.memory_space<vmem>>, vector<1x8x32xf32>
    %21 = vector.shape_cast %20 : vector<1x8x32xf32> to vector<8x32xf32>
    %cst_21 = arith.constant dense<0.000000e+00> : vector<8x384xf32>
    %22 = tpu.matmul %21, %19, %cst_21 {dimension_numbers = #tpu.dot_dimension_numbers<[1], [0], [0], [1], [0, 0, 1, 1], [], []>} : vector<8x32xf32>, vector<32x384xf32>, vector<8x384xf32> -> vector<8x384xf32>
    %23 = arith.addf %18, %22 : vector<8x384xf32>
    %c0_22 = arith.constant 0 : index
    %c20 = arith.constant 20 : index
    %24 = vector.load %arg1[%c0_22, %c20] : memref<32x512xf32, #tpu.memory_space<vmem>>, vector<32x384xf32>
    %c5 = arith.constant 5 : index
    %c0_23 = arith.constant 0 : index
    %c0_24 = arith.constant 0 : index
    %25 = vector.load %arg2[%c5, %c0_23, %c0_24] : memref<9x8x32xf32, #tpu.memory_space<vmem>>, vector<1x8x32xf32>
    %26 = vector.shape_cast %25 : vector<1x8x32xf32> to vector<8x32xf32>
    %cst_25 = arith.constant dense<0.000000e+00> : vector<8x384xf32>
    %27 = tpu.matmul %26, %24, %cst_25 {dimension_numbers = #tpu.dot_dimension_numbers<[1], [0], [0], [1], [0, 0, 1, 1], [], []>} : vector<8x32xf32>, vector<32x384xf32>, vector<8x384xf32> -> vector<8x384xf32>
    %28 = arith.addf %23, %27 : vector<8x384xf32>
    %c0_26 = arith.constant 0 : index
    %c36 = arith.constant 36 : index
    %29 = vector.load %arg1[%c0_26, %c36] : memref<32x512xf32, #tpu.memory_space<vmem>>, vector<32x384xf32>
    %c6 = arith.constant 6 : index
    %c0_27 = arith.constant 0 : index
    %c0_28 = arith.constant 0 : index
    %30 = vector.load %arg2[%c6, %c0_27, %c0_28] : memref<9x8x32xf32, #tpu.memory_space<vmem>>, vector<1x8x32xf32>
    %31 = vector.shape_cast %30 : vector<1x8x32xf32> to vector<8x32xf32>
    %cst_29 = arith.constant dense<0.000000e+00> : vector<8x384xf32>
    %32 = tpu.matmul %31, %29, %cst_29 {dimension_numbers = #tpu.dot_dimension_numbers<[1], [0], [0], [1], [0, 0, 1, 1], [], []>} : vector<8x32xf32>, vector<32x384xf32>, vector<8x384xf32> -> vector<8x384xf32>
    %33 = arith.addf %28, %32 : vector<8x384xf32>
    %c0_30 = arith.constant 0 : index
    %c37 = arith.constant 37 : index
    %34 = vector.load %arg1[%c0_30, %c37] : memref<32x512xf32, #tpu.memory_space<vmem>>, vector<32x384xf32>
    %c7 = arith.constant 7 : index
    %c0_31 = arith.constant 0 : index
    %c0_32 = arith.constant 0 : index
    %35 = vector.load %arg2[%c7, %c0_31, %c0_32] : memref<9x8x32xf32, #tpu.memory_space<vmem>>, vector<1x8x32xf32>
    %36 = vector.shape_cast %35 : vector<1x8x32xf32> to vector<8x32xf32>
    %cst_33 = arith.constant dense<0.000000e+00> : vector<8x384xf32>
    %37 = tpu.matmul %36, %34, %cst_33 {dimension_numbers = #tpu.dot_dimension_numbers<[1], [0], [0], [1], [0, 0, 1, 1], [], []>} : vector<8x32xf32>, vector<32x384xf32>, vector<8x384xf32> -> vector<8x384xf32>
    %38 = arith.addf %33, %37 : vector<8x384xf32>
    %c0_34 = arith.constant 0 : index
    %c38 = arith.constant 38 : index
    %39 = vector.load %arg1[%c0_34, %c38] : memref<32x512xf32, #tpu.memory_space<vmem>>, vector<32x384xf32>
    %c8 = arith.constant 8 : index
    %c0_35 = arith.constant 0 : index
    %c0_36 = arith.constant 0 : index
    %40 = vector.load %arg2[%c8, %c0_35, %c0_36] : memref<9x8x32xf32, #tpu.memory_space<vmem>>, vector<1x8x32xf32>
    %41 = vector.shape_cast %40 : vector<1x8x32xf32> to vector<8x32xf32>
    %cst_37 = arith.constant dense<0.000000e+00> : vector<8x384xf32>
    %42 = tpu.matmul %41, %39, %cst_37 {dimension_numbers = #tpu.dot_dimension_numbers<[1], [0], [0], [1], [0, 0, 1, 1], [], []>} : vector<8x32xf32>, vector<32x384xf32>, vector<8x384xf32> -> vector<8x384xf32>
    %43 = arith.addf %38, %42 : vector<8x384xf32>
    %c0_38 = arith.constant 0 : index
    %c0_39 = arith.constant 0 : index
    %44 = vector.load %arg3[%c0_38, %c0_39] : memref<8x1xf32, #tpu.memory_space<vmem>>, vector<8x1xf32>
    %45 = vector.broadcast %44 : vector<8x1xf32> to vector<8x384xf32>
    %46 = arith.addf %43, %45 : vector<8x384xf32>
    %cst_40 = arith.constant 0.000000e+00 : f32
    %47 = vector.broadcast %cst_40 : f32 to vector<8x384xf32>
    %48 = arith.maximumf %46, %47 : vector<8x384xf32>
    %c0_41 = arith.constant 0 : index
    %c0_42 = arith.constant 0 : index
    %49 = vector.load %arg4[%c0_41, %c0_42] : memref<8x1xf32, #tpu.memory_space<vmem>>, vector<8x1xf32>
    %50 = vector.broadcast %49 : vector<8x1xf32> to vector<8x384xf32>
    %51 = arith.mulf %48, %50 : vector<8x384xf32>
    %cst_43 = arith.constant dense<0.000000e+00> : vector<384xf32>
    %52 = vector.multi_reduction <add>, %51, %cst_43 [0] : vector<8x384xf32> to vector<384xf32>
    %53 = vector.shape_cast %52 : vector<384xf32> to vector<1x384xf32>
    %c0_44 = arith.constant 0 : index
    %c0_45 = arith.constant 0 : index
    %54 = vector.load %arg5[%c0_44, %c0_45] : memref<1x1xf32, #tpu.memory_space<vmem>>, vector<1x1xf32>
    %55 = vector.broadcast %54 : vector<1x1xf32> to vector<1x384xf32>
    %56 = arith.addf %53, %55 : vector<1x384xf32>
    %57 = arith.negf %56 : vector<1x384xf32>
    %58 = math.exp %57 : vector<1x384xf32>
    %cst_46 = arith.constant 1.000000e+00 : f32
    %59 = vector.broadcast %cst_46 : f32 to vector<1x384xf32>
    %60 = arith.addf %59, %58 : vector<1x384xf32>
    %61 = arith.divf %59, %60 : vector<1x384xf32>
    %c0_47 = arith.constant 0 : index
    %c0_48 = arith.constant 0 : index
    %62 = vector.load %arg6[%c0_47, %c0_48] : memref<1x384xf32, #tpu.memory_space<vmem>>, vector<1x384xf32>
    tpu.vector_store %arg6[%c0_47, %c0_48], %61 {strides = array<i32>} : memref<1x384xf32, #tpu.memory_space<vmem>>, vector<1x384xf32>,
    return
  }
  func.func @transform_0(%arg0: i32) -> (i32, i32) {
    %c0_i32 = arith.constant 0 : i32
    %c0_i32_0 = arith.constant 0 : i32
    return %c0_i32, %arg0 : i32, i32
  }
  func.func @transform_1(%arg0: i32) -> (i32, i32, i32) {
    %c0_i32 = arith.constant 0 : i32
    %c0_i32_0 = arith.constant 0 : i32
    %c0_i32_1 = arith.constant 0 : i32
    %c0_i32_2 = arith.constant 0 : i32
    return %c0_i32, %c0_i32_0, %c0_i32_1 : i32, i32, i32
  }
  func.func @transform_2(%arg0: i32) -> (i32, i32) {
    %c0_i32 = arith.constant 0 : i32
    %c0_i32_0 = arith.constant 0 : i32
    %c0_i32_1 = arith.constant 0 : i32
    return %c0_i32, %c0_i32_0 : i32, i32
  }
  func.func @transform_3(%arg0: i32) -> (i32, i32) {
    %c0_i32 = arith.constant 0 : i32
    %c0_i32_0 = arith.constant 0 : i32
    %c0_i32_1 = arith.constant 0 : i32
    return %c0_i32, %c0_i32_0 : i32, i32
  }
  func.func @transform_4(%arg0: i32) -> (i32, i32) {
    %c0_i32 = arith.constant 0 : i32
    %c0_i32_0 = arith.constant 0 : i32
    %c0_i32_1 = arith.constant 0 : i32
    return %c0_i32, %c0_i32_0 : i32, i32
  }
  func.func @transform_5(%arg0: i32) -> (i32, i32) {
    %c0_i32 = arith.constant 0 : i32
    %c0_i32_0 = arith.constant 0 : i32
    return %c0_i32, %arg0 : i32, i32
  }
}

</mosaic_0001>

<llo_original>
// kernel: squeeze.3
$region0: #{squeeze.3}
  %s0 = inlined_call_operand.vmem [shape: f32[648], index: 0, kind: input, shape index: {}]
  %s1 = inlined_call_operand.vmem [shape: f32[2,18,18], index: 1, kind: output, shape index: {}]
  %v2 = vld [vmem:[%s0] sm:$0x1]
  %vm3 = vcmask 146432
  %4 = vst.msk [vmem:[%s1] sm:$0x1] %vm3, %v2
  %s5 = scalar_lea.vmem %s0, 4
  %v6 = vld [vmem:[%s5] sm:$0x1]
  %7 = vrot.lane.b32.xlu0 %v6, 118
  %v8 = vpop.permute.xlu0 %7
  %vm9 = vcmask 146432
  %s10 = scalar_lea.vmem %s1, 35
  %11 = vst.msk [vmem:[%s10] sm:$0x1] %vm9, %v8
  %s12 = scalar_lea.vmem %s0, 3
  %v13 = vld [vmem:[%s12] sm:$0x1]
  %14 = vrot.lane.b32.xlu0 %v13, 116
  %v15 = vpop.permute.xlu0 %14
  %vm16 = vcmask 146432
  %s17 = scalar_lea.vmem %s1, 28
  %18 = vst.msk [vmem:[%s17] sm:$0x1] %vm16, %v15
  %s19 = scalar_lea.vmem %s0, 2
  %v20 = vld [vmem:[%s19] sm:$0x1]
  %21 = vrot.lane.b32.xlu0 %v20, 114
  %v22 = vpop.permute.xlu0 %21
  %vm23 = vcmask 146432
  %s24 = scalar_lea.vmem %s1, 15
  %25 = vst.msk [vmem:[%s24] sm:$0x1] %vm23, %v22
  %s26 = scalar_lea.vmem %s0, 1
  %v27 = vld [vmem:[%s26] sm:$0x1]
  %28 = vrot.lane.b32.xlu0 %v27, 112
  %v29 = vpop.permute.xlu0 %28
  %vm30 = vcmask 146432
  %s31 = scalar_lea.vmem %s1, 8
  %32 = vst.msk [vmem:[%s31] sm:$0x1] %vm30, %v29
  %v33 = vld [vmem:[%s0] sm:$0x1]
  %34 = vrot.lane.b32.xlu0 %v33, 110
  %v35 = vpop.permute.xlu0 %34
  %vm36 = vcmask 146432
  %s37 = scalar_lea.vmem %s1, 1
  %38 = vst.msk [vmem:[%s37] sm:$0x1] %vm36, %v35
  %s39 = scalar_lea.vmem %s0, 4
  %v40 = vld [vmem:[%s39] sm:$0x1]
  %41 = vrot.lane.b32.xlu0 %v40, 100
  %v42 = vpop.permute.xlu0 %41
  %vm43 = vcmask 146432
  %s44 = scalar_lea.vmem %s1, 36
  %45 = vst.msk [vmem:[%s44] sm:$0x1] %vm43, %v42
  %s46 = scalar_lea.vmem %s0, 3
  %v47 = vld [vmem:[%s46] sm:$0x1]
  %48 = vrot.lane.b32.xlu0 %v47, 98
  %v49 = vpop.permute.xlu0 %48
  %vm50 = vcmask 146432
  %s51 = scalar_lea.vmem %s1, 29
  %52 = vst.msk [vmem:[%s51] sm:$0x1] %vm50, %v49
  %s53 = scalar_lea.vmem %s0, 2
  %v54 = vld [vmem:[%s53] sm:$0x1]
  %55 = vrot.lane.b32.xlu0 %v54, 96
  %v56 = vpop.permute.xlu0 %55
  %vm57 = vcmask 146432
  %s58 = scalar_lea.vmem %s1, 16
  %59 = vst.msk [vmem:[%s58] sm:$0x1] %vm57, %v56
  %s60 = scalar_lea.vmem %s0, 1
  %v61 = vld [vmem:[%s60] sm:$0x1]
  %62 = vrot.lane.b32.xlu0 %v61, 94
  %v63 = vpop.permute.xlu0 %62
  %vm64 = vcmask 146432
  %s65 = scalar_lea.vmem %s1, 9
  %66 = vst.msk [vmem:[%s65] sm:$0x1] %vm64, %v63
  %v67 = vld [vmem:[%s0] sm:$0x1]
  %68 = vrot.lane.b32.xlu0 %v67, 92
  %v69 = vpop.permute.xlu0 %68
  %vm70 = vcmask 146432
  %s71 = scalar_lea.vmem %s1, 2
  %72 = vst.msk [vmem:[%s71] sm:$0x1] %vm70, %v69
  %s73 = scalar_lea.vmem %s0, 4
  %v74 = vld [vmem:[%s73] sm:$0x1]
  %75 = vrot.lane.b32.xlu0 %v74, 82
  %v76 = vpop.permute.xlu0 %75
  %vm77 = vcmask 146432
  %s78 = scalar_lea.vmem %s1, 37
  %79 = vst.msk [vmem:[%s78] sm:$0x1] %vm77, %v76
  %s80 = scalar_lea.vmem %s0, 3
  %v81 = vld [vmem:[%s80] sm:$0x1]
  %82 = vrot.lane.b32.xlu0 %v81, 80
  %v83 = vpop.permute.xlu0 %82
  %vm84 = vcmask 146432
  %s85 = scalar_lea.vmem %s1, 30
  %86 = vst.msk [vmem:[%s85] sm:$0x1] %vm84, %v83
  %s87 = scalar_lea.vmem %s0, 2
  %v88 = vld [vmem:[%s87] sm:$0x1]
  %89 = vrot.lane.b32.xlu0 %v88, 78
  %v90 = vpop.permute.xlu0 %89
  %vm91 = vcmask 146432
  %s92 = scalar_lea.vmem %s1, 17
  %93 = vst.msk [vmem:[%s92] sm:$0x1] %vm91, %v90
  %s94 = scalar_lea.vmem %s0, 1
  %v95 = vld [vmem:[%s94] sm:$0x1]
  %96 = vrot.lane.b32.xlu0 %v95, 76
  %v97 = vpop.permute.xlu0 %96
  %vm98 = vcmask 146432
  %s99 = scalar_lea.vmem %s1, 10
  %100 = vst.msk [vmem:[%s99] sm:$0x1] %vm98, %v97
  %v101 = vld [vmem:[%s0] sm:$0x1]
  %102 = vrot.lane.b32.xlu0 %v101, 74
  %v103 = vpop.permute.xlu0 %102
  %vm104 = vcmask 146432
  %s105 = scalar_lea.vmem %s1, 3
  %106 = vst.msk [vmem:[%s105] sm:$0x1] %vm104, %v103
  %s107 = scalar_lea.vmem %s0, 4
  %v108 = vld [vmem:[%s107] sm:$0x1]
  %109 = vrot.lane.b32.xlu0 %v108, 64
  %v110 = vpop.permute.xlu0 %109
  %vm111 = vcmask 146432
  %s112 = scalar_lea.vmem %s1, 38
  %113 = vst.msk [vmem:[%s112] sm:$0x1] %vm111, %v110
  %s114 = scalar_lea.vmem %s0, 3
  %v115 = vld [vmem:[%s114] sm:$0x1]
  %116 = vrot.lane.b32.xlu0 %v115, 62
  %v117 = vpop.permute.xlu0 %116
  %vm118 = vcmask 146432
  %s119 = scalar_lea.vmem %s1, 31
  %120 = vst.msk [vmem:[%s119] sm:$0x1] %vm118, %v117
  %s121 = scalar_lea.vmem %s0, 2
  %v122 = vld [vmem:[%s121] sm:$0x1]
  %123 = vrot.lane.b32.xlu0 %v122, 60
  %v124 = vpop.permute.xlu0 %123
  %vm125 = vcmask 146432
  %s126 = scalar_lea.vmem %s1, 24
  %127 = vst.msk [vmem:[%s126] sm:$0x1] %vm125, %v124
  %s128 = scalar_lea.vmem %s0, 1
  %v129 = vld [vmem:[%s128] sm:$0x1]
  %130 = vrot.lane.b32.xlu0 %v129, 58
  %v131 = vpop.permute.xlu0 %130
  %vm132 = vcmask 146432
  %s133 = scalar_lea.vmem %s1, 11
  %134 = vst.msk [vmem:[%s133] sm:$0x1] %vm132, %v131
  %v135 = vld [vmem:[%s0] sm:$0x1]
  %136 = vrot.lane.b32.xlu0 %v135, 56
  %v137 = vpop.permute.xlu0 %136
  %vm138 = vcmask 146432
  %s139 = scalar_lea.vmem %s1, 4
  %140 = vst.msk [vmem:[%s139] sm:$0x1] %vm138, %v137
  %s141 = scalar_lea.vmem %s0, 4
  %v142 = vld [vmem:[%s141] sm:$0x1]
  %143 = vrot.lane.b32.xlu0 %v142, 46
  %v144 = vpop.permute.xlu0 %143
  %vm145 = vcmask 146432
  %s146 = scalar_lea.vmem %s1, 39
  %147 = vst.msk [vmem:[%s146] sm:$0x1] %vm145, %v144
  %s148 = scalar_lea.vmem %s0, 3
  %v149 = vld [vmem:[%s148] sm:$0x1]
  %150 = vrot.lane.b32.xlu0 %v149, 44
  %v151 = vpop.permute.xlu0 %150
  %vm152 = vcmask 146432
  %s153 = scalar_lea.vmem %s1, 32
  %154 = vst.msk [vmem:[%s153] sm:$0x1] %vm152, %v151
  %s155 = scalar_lea.vmem %s0, 2
  %v156 = vld [vmem:[%s155] sm:$0x1]
  %157 = vrot.lane.b32.xlu0 %v156, 42
  %v158 = vpop.permute.xlu0 %157
  %vm159 = vcmask 146432
  %s160 = scalar_lea.vmem %s1, 25
  %161 = vst.msk [vmem:[%s160] sm:$0x1] %vm159, %v158
  %s162 = scalar_lea.vmem %s0, 1
  %v163 = vld [vmem:[%s162] sm:$0x1]
  %164 = vrot.lane.b32.xlu0 %v163, 40
  %v165 = vpop.permute.xlu0 %164
  %vm166 = vcmask 146432
  %s167 = scalar_lea.vmem %s1, 12
  %168 = vst.msk [vmem:[%s167] sm:$0x1] %vm166, %v165
  %v169 = vld [vmem:[%s0] sm:$0x1]
  %170 = vrot.lane.b32.xlu0 %v169, 38
  %v171 = vpop.permute.xlu0 %170
  %vm172 = vcmask 146432
  %s173 = scalar_lea.vmem %s1, 5
  %174 = vst.msk [vmem:[%s173] sm:$0x1] %vm172, %v171
  %s175 = scalar_lea.vmem %s0, 4
  %v176 = vld [vmem:[%s175] sm:$0x1]
  %177 = vrot.lane.b32.xlu0 %v176, 28
  %v178 = vpop.permute.xlu0 %177
  %vm179 = vcmask 146432
  %s180 = scalar_lea.vmem %s1, 40
  %181 = vst.msk [vmem:[%s180] sm:$0x1] %vm179, %v178
  %s182 = scalar_lea.vmem %s0, 3
  %v183 = vld [vmem:[%s182] sm:$0x1]
  %184 = vrot.lane.b32.xlu0 %v183, 26
  %v185 = vpop.permute.xlu0 %184
  %vm186 = vcmask 146432
  %s187 = scalar_lea.vmem %s1, 33
  %188 = vst.msk [vmem:[%s187] sm:$0x1] %vm186, %v185
  %s189 = scalar_lea.vmem %s0, 2
  %v190 = vld [vmem:[%s189] sm:$0x1]
  %191 = vrot.lane.b32.xlu0 %v190, 24
  %v192 = vpop.permute.xlu0 %191
  %vm193 = vcmask 146432
  %s194 = scalar_lea.vmem %s1, 26
  %195 = vst.msk [vmem:[%s194] sm:$0x1] %vm193, %v192
  %s196 = scalar_lea.vmem %s0, 1
  %v197 = vld [vmem:[%s196] sm:$0x1]
  %198 = vrot.lane.b32.xlu0 %v197, 22
  %v199 = vpop.permute.xlu0 %198
  %vm200 = vcmask 146432
  %s201 = scalar_lea.vmem %s1, 13
  %202 = vst.msk [vmem:[%s201] sm:$0x1] %vm200, %v199
  %v203 = vld [vmem:[%s0] sm:$0x1]
  %204 = vrot.lane.b32.xlu0 %v203, 20
  %v205 = vpop.permute.xlu0 %204
  %vm206 = vcmask 146432
  %s207 = scalar_lea.vmem %s1, 6
  %208 = vst.msk [vmem:[%s207] sm:$0x1] %vm206, %v205
  %s209 = scalar_lea.vmem %s0, 4
  %v210 = vld [vmem:[%s209] sm:$0x1]
  %s211 = scalar_lea.vmem %s0, 5
  %v212 = vld [vmem:[%s211] sm:$0x1]
  %vm213 = vcmask 965632
  %v214 = vsel %vm213, %v212, %v210
  %215 = vrot.lane.b32.xlu0 %v214, 10
  %v216 = vpop.permute.xlu0 %215
  %vm217 = vcmask 80896
  %s218 = scalar_lea.vmem %s1, 41
  %219 = vst.msk [vmem:[%s218] sm:$0x1] %vm217, %v216
  %vm220 = vcmask 146512
  %s221 = scalar_lea.vmem %s1, 41
  %222 = vst.msk [vmem:[%s221] sm:$0x1] %vm220, %v216
  %s223 = scalar_lea.vmem %s0, 3
  %v224 = vld [vmem:[%s223] sm:$0x1]
  %s225 = scalar_lea.vmem %s0, 4
  %v226 = vld [vmem:[%s225] sm:$0x1]
  %vm227 = vcmask 982016
  %v228 = vsel %vm227, %v226, %v224
  %229 = vrot.lane.b32.xlu0 %v228, 8
  %v230 = vpop.permute.xlu0 %229
  %vm231 = vcmask 64512
  %s232 = scalar_lea.vmem %s1, 34
  %233 = vst.msk [vmem:[%s232] sm:$0x1] %vm231, %v230
  %vm234 = vcmask 146496
  %s235 = scalar_lea.vmem %s1, 34
  %236 = vst.msk [vmem:[%s235] sm:$0x1] %vm234, %v230
  %s237 = scalar_lea.vmem %s0, 2
  %v238 = vld [vmem:[%s237] sm:$0x1]
  %s239 = scalar_lea.vmem %s0, 3
  %v240 = vld [vmem:[%s239] sm:$0x1]
  %vm241 = vcmask 998400
  %v242 = vsel %vm241, %v240, %v238
  %243 = vrot.lane.b32.xlu0 %v242, 6
  %v244 = vpop.permute.xlu0 %243
  %vm245 = vcmask 48128
  %s246 = scalar_lea.vmem %s1, 27
  %247 = vst.msk [vmem:[%s246] sm:$0x1] %vm245, %v244
  %vm248 = vcmask 146480
  %s249 = scalar_lea.vmem %s1, 27
  %250 = vst.msk [vmem:[%s249] sm:$0x1] %vm248, %v244
  %s251 = scalar_lea.vmem %s0, 1
  %v252 = vld [vmem:[%s251] sm:$0x1]
  %s253 = scalar_lea.vmem %s0, 2
  %v254 = vld [vmem:[%s253] sm:$0x1]
  %vm255 = vcmask 1014784
  %v256 = vsel %vm255, %v254, %v252
  %257 = vrot.lane.b32.xlu0 %v256, 4
  %v258 = vpop.permute.xlu0 %257
  %vm259 = vcmask 31744
  %s260 = scalar_lea.vmem %s1, 14
  %261 = vst.msk [vmem:[%s260] sm:$0x1] %vm259, %v258
  %vm262 = vcmask 146464
  %s263 = scalar_lea.vmem %s1, 14
  %264 = vst.msk [vmem:[%s263] sm:$0x1] %vm262, %v258
  %v265 = vld [vmem:[%s0] sm:$0x1]
  %s266 = scalar_lea.vmem %s0, 1
  %v267 = vld [vmem:[%s266] sm:$0x1]
  %vm268 = vcmask 1031168
  %v269 = vsel %vm268, %v267, %v265
  %270 = vrot.lane.b32.xlu0 %v269, 2
  %v271 = vpop.permute.xlu0 %270
  %vm272 = vcmask 15360
  %s273 = scalar_lea.vmem %s1, 7
  %274 = vst.msk [vmem:[%s273] sm:$0x1] %vm272, %v271
  %vm275 = vcmask 146448
  %s276 = scalar_lea.vmem %s1, 7
  %277 = vst.msk [vmem:[%s276] sm:$0x1] %vm275, %v271

// kernel: proj_layers_forward.1
$region0: #{proj_layers_forward.1}
  #allocation0 [shape = 'u32[]', space=smem, size = 0x4, offset = 0x4, fixed_abs, tag = 'smem constant byte address 0x4 - core index']
  #allocation1 [shape = 'u32[72,128]{1,0:T(1,128)}', space=vmem, size = 0x9000, scoped, tag = 'internal scratch']
  #allocation2 [shape = 'f32[1,1]{1,0:T(1,128)S(1)}', space=vmem, size = 0x200, scoped, tag = 'scoped memory for proj_layers_forward.1']
  %s0 = inlined_call_operand.vmem [shape: f32[32,1024], index: 0, kind: input, shape index: {}]
  %s1 = inlined_call_operand.vmem [shape: f32[9,8,32], index: 1, kind: input, shape index: {}]
  %s2 = inlined_call_operand.vmem [shape: f32[8,1], index: 2, kind: input, shape index: {}]
  %s3 = inlined_call_operand.vmem [shape: f32[8,1], index: 3, kind: input, shape index: {}]
  %s4 = inlined_call_operand.<no memory space> [shape: f32[1,1], index: 4, kind: input, shape index: {}]
  %s5 = inlined_call_operand.vmem [shape: f32[1,768], index: 5, kind: output, shape index: {}]
  %s6 = sld [smem:[#allocation0]]
  $region76: #{proj_layers_forward.1} parent=0
    _
  %s8 = ssub.s32 1, %s6
  %s9 = scalar_select 0, %s8, %s6
  %v10 = vstv %s4
  %11 = vst [vmem:[#allocation2] sm:$0x1] %v10
  $region1: #{proj_layers_forward.1} parent=0
    #allocation3 [shape = 'u8[131072]{0}', space=vmem, size = 0x20000, scoped, tag = 'input window, operand 0']
    loop: start=0, step=1, limit=4
    $region2: #{proj_layers_forward.1} parent=1 // loop_pre_header
      _
    $region3: #{proj_layers_forward.1} parent=1 // loop_header
      %s13 = sphi 0, %s17
      %p14 = scmp.ge.s32.totalorder %s13, 4
      %s23 = sphi 0, %s25
      %s26 = sphi 0, %s23
      %s27 = sphi 0, %s26
      %s43 = sphi 0, %s27
      %s47 = sphi 0, %s47
      %s49 = sphi 0, %s47
      %s50 = sphi 0, %s49
      %s64 = sphi 0, %s50
      %s68 = sphi 0, %s68
      %s70 = sphi 0, %s68
      %s71 = sphi 0, %s70
      %s85 = sphi 0, %s71
      %s89 = sphi 0, %s89
      %s91 = sphi 0, %s89
      %s92 = sphi 0, %s91
      %s106 = sphi 0, %s92
      %s110 = sphi 0, %s110
      %s112 = sphi 0, %s110
      %s113 = sphi 0, %s112
      %s127 = sphi 0, %s113
      %s133 = sphi 0, %s135
      %s136 = sphi 0, %s133
      %s137 = sphi 0, %s136
      %s153 = sphi 0, %s137
    $region4: #{proj_layers_forward.1} parent=1 // loop_header_branch
      %16 = sbr.rel (%p14) target = $region8
    $region5: #{proj_layers_forward.1} parent=1 // loop_body
      %s18 = ssub.s32 %s13, 1
      %s19 = ssub.s32 %s13, 2
      %s20 = sadd.s32 %s13, 1
      %s21 = ssub.s32 %s13, %s20
      %p22 = scmp.eq.s32.totalorder %s21, 0
      %s24 = sadd.s32 %s23, 1
      %s25 = scalar_select %p22, %s23, %s24
      %p28 = pneg %p22
      %p29 = scmp.eq.s32.totalorder %s13, 1
      %p30 = por %p28, %p29
      %p31 = scmp.ne.s32.totalorder %s23, %s26
      %p32 = scmp.eq.s32.totalorder %s13, 0
      %p33 = por %p31, %p32
      %p34 = scmp.ne.s32.totalorder %s23, %s26
      %p35 = scmp.eq.s32.totalorder %s18, 1
      %p36 = por %p34, %p35
      %p37 = scmp.ne.s32.totalorder %s26, %s27
      %p38 = scmp.eq.s32.totalorder %s18, 0
      %p39 = por %p37, %p38
      %p40 = scmp.ne.s32.totalorder %s26, %s27
      %p41 = scmp.eq.s32.totalorder %s19, 1
      %p42 = por %p40, %p41
      %p44 = scmp.ne.s32.totalorder %s27, %s43
      %p45 = scmp.eq.s32.totalorder %s19, 0
      %p46 = por %p44, %p45
      %s48 = sadd.s32 %s47, 1
      %p51 = scmp.eq.s32.totalorder %s13, 1
      %p52 = scmp.ne.s32.totalorder %s47, %s49
      %p53 = scmp.eq.s32.totalorder %s13, 0
      %p54 = por %p52, %p53
      %p55 = scmp.ne.s32.totalorder %s47, %s49
      %p56 = scmp.eq.s32.totalorder %s18, 1
      %p57 = por %p55, %p56
      %p58 = scmp.ne.s32.totalorder %s49, %s50
      %p59 = scmp.eq.s32.totalorder %s18, 0
      %p60 = por %p58, %p59
      %p61 = scmp.ne.s32.totalorder %s49, %s50
      %p62 = scmp.eq.s32.totalorder %s19, 1
      %p63 = por %p61, %p62
      %p65 = scmp.ne.s32.totalorder %s50, %s64
      %p66 = scmp.eq.s32.totalorder %s19, 0
      %p67 = por %p65, %p66
      %s69 = sadd.s32 %s68, 1
      %p72 = scmp.eq.s32.totalorder %s13, 1
      %p73 = scmp.ne.s32.totalorder %s68, %s70
      %p74 = scmp.eq.s32.totalorder %s13, 0
      %p75 = por %p73, %p74
      %p76 = scmp.ne.s32.totalorder %s68, %s70
      %p77 = scmp.eq.s32.totalorder %s18, 1
      %p78 = por %p76, %p77
      %p79 = scmp.ne.s32.totalorder %s70, %s71
      %p80 = scmp.eq.s32.totalorder %s18, 0
      %p81 = por %p79, %p80
      %p82 = scmp.ne.s32.totalorder %s70, %s71
      %p83 = scmp.eq.s32.totalorder %s19, 1
      %p84 = por %p82, %p83
      %p86 = scmp.ne.s32.totalorder %s71, %s85
      %p87 = scmp.eq.s32.totalorder %s19, 0
      %p88 = por %p86, %p87
      %s90 = sadd.s32 %s89, 1
      %p93 = scmp.eq.s32.totalorder %s13, 1
      %p94 = scmp.ne.s32.totalorder %s89, %s91
      %p95 = scmp.eq.s32.totalorder %s13, 0
      %p96 = por %p94, %p95
      %p97 = scmp.ne.s32.totalorder %s89, %s91
      %p98 = scmp.eq.s32.totalorder %s18, 1
      %p99 = por %p97, %p98
      %p100 = scmp.ne.s32.totalorder %s91, %s92
      %p101 = scmp.eq.s32.totalorder %s18, 0
      %p102 = por %p100, %p101
      %p103 = scmp.ne.s32.totalorder %s91, %s92
      %p104 = scmp.eq.s32.totalorder %s19, 1
      %p105 = por %p103, %p104
      %p107 = scmp.ne.s32.totalorder %s92, %s106
      %p108 = scmp.eq.s32.totalorder %s19, 0
      %p109 = por %p107, %p108
      %s111 = sadd.s32 %s110, 1
      %p114 = scmp.eq.s32.totalorder %s13, 1
      %p115 = scmp.ne.s32.totalorder %s110, %s112
      %p116 = scmp.eq.s32.totalorder %s13, 0
      %p117 = por %p115, %p116
      %p118 = scmp.ne.s32.totalorder %s110, %s112
      %p119 = scmp.eq.s32.totalorder %s18, 1
      %p120 = por %p118, %p119
      %p121 = scmp.ne.s32.totalorder %s112, %s113
      %p122 = scmp.eq.s32.totalorder %s18, 0
      %p123 = por %p121, %p122
      %p124 = scmp.ne.s32.totalorder %s112, %s113
      %p125 = scmp.eq.s32.totalorder %s19, 1
      %p126 = por %p124, %p125
      %p128 = scmp.ne.s32.totalorder %s113, %s127
      %p129 = scmp.eq.s32.totalorder %s19, 0
      %p130 = por %p128, %p129
      %s131 = ssub.s32 %s13, %s20
      %p132 = scmp.eq.s32.totalorder %s131, 0
      %s134 = sadd.s32 %s133, 1
      %s135 = scalar_select %p132, %s133, %s134
      %p138 = pneg %p132
      %p139 = scmp.eq.s32.totalorder %s13, 1
      %p140 = por %p138, %p139
      %p141 = scmp.ne.s32.totalorder %s133, %s136
      %p142 = scmp.eq.s32.totalorder %s13, 0
      %p143 = por %p141, %p142
      %p144 = scmp.ne.s32.totalorder %s133, %s136
      %p145 = scmp.eq.s32.totalorder %s18, 1
      %p146 = por %p144, %p145
      %p147 = scmp.ne.s32.totalorder %s136, %s137
      %p148 = scmp.eq.s32.totalorder %s18, 0
      %p149 = por %p147, %p148
      %p150 = scmp.ne.s32.totalorder %s136, %s137
      %p151 = scmp.eq.s32.totalorder %s19, 1
      %p152 = por %p150, %p151
      %p154 = scmp.ne.s32.totalorder %s137, %s153
      %p155 = scmp.eq.s32.totalorder %s19, 0
      %p156 = por %p154, %p155
      %p157 = scmp.le.s32.totalorder 1, %s13
      %p158 = scmp.lt.s32.totalorder %s13, 3
      %p159 = pnand %p157, %p158
      %p160 = pneg %p159
      // Predicated region
      $region9: #{proj_layers_forward.1} parent=5 // pred_check
        _
      $region10: #{proj_layers_forward.1} parent=5 // pred_check_branch
        %162 = sbr.rel (%p159) target = $region12
      $region11: #{proj_layers_forward.1} parent=5 // pred_region
        %s163 = ssub.s32 %s13, 1
        // Predicated region
        $region13: #{proj_layers_forward.1} parent=11 // pred_check
          %p164 = pneg %p60
        $region14: #{proj_layers_forward.1} parent=11 // pred_check_branch
          %166 = sbr.rel (%p164) target = $region16
        $region15: #{proj_layers_forward.1} parent=11 // pred_region
          _
        $region16: #{proj_layers_forward.1} parent=11 // pred_fallthru
          _
        // Predicated region
        $region17: #{proj_layers_forward.1} parent=11 // pred_check
          %p167 = pneg %p81
        $region18: #{proj_layers_forward.1} parent=11 // pred_check_branch
          %169 = sbr.rel (%p167) target = $region20
        $region19: #{proj_layers_forward.1} parent=11 // pred_region
          _
        $region20: #{proj_layers_forward.1} parent=11 // pred_fallthru
          _
        // Predicated region
        $region21: #{proj_layers_forward.1} parent=11 // pred_check
          %p170 = pneg %p102
        $region22: #{proj_layers_forward.1} parent=11 // pred_check_branch
          %172 = sbr.rel (%p170) target = $region24
        $region23: #{proj_layers_forward.1} parent=11 // pred_region
          _
        $region24: #{proj_layers_forward.1} parent=11 // pred_fallthru
          _
        // Predicated region
        $region25: #{proj_layers_forward.1} parent=11 // pred_check
          %p173 = pneg %p123
        $region26: #{proj_layers_forward.1} parent=11 // pred_check_branch
          %175 = sbr.rel (%p173) target = $region28
        $region27: #{proj_layers_forward.1} parent=11 // pred_region
          _
        $region28: #{proj_layers_forward.1} parent=11 // pred_fallthru
          _
      $region12: #{proj_layers_forward.1} parent=5 // pred_fallthru
        _
      %p176 = scmp.lt.s32.totalorder %s13, 2
      // Predicated region
      $region29: #{proj_layers_forward.1} parent=5 // pred_check
        %p177 = pneg %p176
      $region30: #{proj_layers_forward.1} parent=5 // pred_check_branch
        %179 = sbr.rel (%p177) target = $region32
      $region31: #{proj_layers_forward.1} parent=5 // pred_region
        // Predicated region
        $region33: #{proj_layers_forward.1} parent=31 // pred_check
          %p180 = pneg %p33
        $region34: #{proj_layers_forward.1} parent=31 // pred_check_branch
          %182 = sbr.rel (%p180) target = $region36
        $region35: #{proj_layers_forward.1} parent=31 // pred_region
          %s183 = sand.u32 %s23, 1
          %s184 = sand.u32 %s23, 1
          %s185 = smul.addr %s184, 128
          %s186 = scalar_lea.vmem [#allocation3], %s185
          %s187 = smul.u32 4, %s13
          %s188 = smul.addr %s187, 8
          %s189 = scalar_lea.vmem %s0, %s188
          // Predicated region
          $region37: #{proj_layers_forward.1} parent=35 // pred_check
            _
          $region38: #{proj_layers_forward.1} parent=35 // pred_check_branch
            %191 = sbr.rel (0) target = $region40
          $region39: #{proj_layers_forward.1} parent=35 // pred_region
            // Predicated region
            $region41: #{proj_layers_forward.1} parent=39 // pred_check
              _
            $region42: #{proj_layers_forward.1} parent=39 // pred_check_branch
              %193 = sbr.rel (0) target = $region44
            $region43: #{proj_layers_forward.1} parent=39 // pred_region
              loop: start=0, step=1, limit=1
              $region45: #{proj_layers_forward.1} parent=43 // loop_pre_header
                _
              $region46: #{proj_layers_forward.1} parent=43 // loop_header
                %s195 = sphi 0, %s199
                %p196 = scmp.ge.s32.totalorder %s195, 1
                %s200 = sphi %s189, %s189
                %s201 = sphi %s186, %s186
              $region47: #{proj_layers_forward.1} parent=43 // loop_header_branch
                %198 = sbr.rel (%p196) target = $region51
              $region48: #{proj_layers_forward.1} parent=43 // loop_body
                %v202 = vld [vmem:[%s200] sm:$0xff]
                %203 = vst [vmem:[%s201] sm:$0xff] %v202
                %v204 = vld [vmem:[%s200 + $0x8] sm:$0xff]
                %205 = vst [vmem:[%s201 + $0x8] sm:$0xff] %v204
                %v206 = vld [vmem:[%s200 + $0x10] sm:$0xff]
                %207 = vst [vmem:[%s201 + $0x10] sm:$0xff] %v206
                %v208 = vld [vmem:[%s200 + $0x18] sm:$0xff]
                %209 = vst [vmem:[%s201 + $0x18] sm:$0xff] %v208
                %v210 = vld [vmem:[%s200 + $0x40] sm:$0xff]
                %211 = vst [vmem:[%s201 + $0x20] sm:$0xff] %v210
                %v212 = vld [vmem:[%s200 + $0x48] sm:$0xff]
                %213 = vst [vmem:[%s201 + $0x28] sm:$0xff] %v212
                %v214 = vld [vmem:[%s200 + $0x50] sm:$0xff]
                %215 = vst [vmem:[%s201 + $0x30] sm:$0xff] %v214
                %v216 = vld [vmem:[%s200 + $0x58] sm:$0xff]
                %217 = vst [vmem:[%s201 + $0x38] sm:$0xff] %v216
                %v218 = vld [vmem:[%s200 + $0x80] sm:$0xff]
                %219 = vst [vmem:[%s201 + $0x40] sm:$0xff] %v218
                %v220 = vld [vmem:[%s200 + $0x88] sm:$0xff]
                %221 = vst [vmem:[%s201 + $0x48] sm:$0xff] %v220
                %v222 = vld [vmem:[%s200 + $0x90] sm:$0xff]
                %223 = vst [vmem:[%s201 + $0x50] sm:$0xff] %v222
                %v224 = vld [vmem:[%s200 + $0x98] sm:$0xff]
                %225 = vst [vmem:[%s201 + $0x58] sm:$0xff] %v224
                %v226 = vld [vmem:[%s200 + $0xc0] sm:$0xff]
                %227 = vst [vmem:[%s201 + $0x60] sm:$0xff] %v226
                %v228 = vld [vmem:[%s200 + $0xc8] sm:$0xff]
                %229 = vst [vmem:[%s201 + $0x68] sm:$0xff] %v228
                %v230 = vld [vmem:[%s200 + $0xd0] sm:$0xff]
                %231 = vst [vmem:[%s201 + $0x70] sm:$0xff] %v230
                %v232 = vld [vmem:[%s200 + $0xd8] sm:$0xff]
                %233 = vst [vmem:[%s201 + $0x78] sm:$0xff] %v232
              $region49: #{proj_layers_forward.1} parent=43 // loop_footer
                %s199 = sadd.s32 1, %s195
              $region50: #{proj_layers_forward.1} parent=43 // loop_footer_branch
                %194 = sbr.rel target = $region46
              $region51: #{proj_layers_forward.1} parent=43 // loop_exit
                _
            $region44: #{proj_layers_forward.1} parent=39 // pred_fallthru
              _
            // Predicated region
            $region52: #{proj_layers_forward.1} parent=39 // pred_check
              _
            $region53: #{proj_layers_forward.1} parent=39 // pred_check_branch
              %235 = sbr.rel target = $region55
            $region54: #{proj_layers_forward.1} parent=39 // pred_region
              _
            $region55: #{proj_layers_forward.1} parent=39 // pred_fallthru
              _
          $region40: #{proj_layers_forward.1} parent=35 // pred_fallthru
            _
          %236 = vnop
        $region36: #{proj_layers_forward.1} parent=31 // pred_fallthru
          _
      $region32: #{proj_layers_forward.1} parent=5 // pred_fallthru
        _
      %p237 = scmp.le.s32.totalorder 1, %s13
      %p238 = scmp.lt.s32.totalorder %s13, 3
      %p239 = pnand %p237, %p238
      %p240 = pneg %p239
      // Predicated region
      $region56: #{proj_layers_forward.1} parent=5 // pred_check
        _
      $region57: #{proj_layers_forward.1} parent=5 // pred_check_branch
        %242 = sbr.rel (%p239) target = $region59
      $region58: #{proj_layers_forward.1} parent=5 // pred_region
        %s243 = ssub.s32 %s13, 1
        %s244 = sand.u32 %s26, 1
        %s245 = sand.u32 %s26, 1
        %s246 = smul.addr %s245, 128
        %s247 = scalar_lea.vmem [#allocation3], %s246
        // Predicated region
        $region60: #{proj_layers_forward.1} parent=58 // pred_check
          %p248 = pneg %p39
        $region61: #{proj_layers_forward.1} parent=58 // pred_check_branch
          %250 = sbr.rel (%p248) target = $region63
        $region62: #{proj_layers_forward.1} parent=58 // pred_region
          _
        $region63: #{proj_layers_forward.1} parent=58 // pred_fallthru
          _
        %s251 = sand.u32 %s26, 1
        %s252 = sand.u32 %s26, 1
        %s253 = smul.addr %s252, 128
        %s254 = scalar_lea.vmem [#allocation3], %s253
        %p255 = pneg %p39
        %p256 = pneg %p36
        %p257 = pneg %p60
        %p258 = pneg %p57
        %p259 = pneg %p81
        %p260 = pneg %p78
        %p261 = pneg %p102
        %p262 = pneg %p99
        %p263 = pneg %p123
        %p264 = pneg %p120
        %p265 = pneg %p149
        %p266 = pneg %p146
        %s267 = smul.u32 3, %s18
        %p268 = scmp.lt.s32.totalorder %s267, 5
        %s269 = scalar_select %p268, %s267, 5
        %s270 = scalar_lea.vmem %s5, %s269
        %s271 = smul.u32 4, %s18
        %s272 = smul.u32 3, %s18
        %p273 = scmp.lt.s32.totalorder %s272, 5
        %s274 = scalar_select %p273, %s272, 5
        %s275 = scalar_lea.vmem %s5, %s274
        %s276 = smul.u32 3, %s18
        %v277 = vld [vmem:[%s247] sm:$0xff]
        %v278 = vld [vmem:[%s247 + $0x8] sm:$0xff]
        %v279 = vld [vmem:[%s247 + $0x10] sm:$0xff]
        %v280 = vld [vmem:[%s247 + $0x20] sm:$0xff]
        %v281 = vld [vmem:[%s247 + $0x28] sm:$0xff]
        %v282 = vld [vmem:[%s247 + $0x30] sm:$0xff]
        %v283 = vld [vmem:[%s247 + $0x40] sm:$0xff]
        %v284 = vld [vmem:[%s247 + $0x48] sm:$0xff]
        %v285 = vld [vmem:[%s247 + $0x50] sm:$0xff]
        %v286 = vld [vmem:[%s247 + $0x60] sm:$0xff]
        %v287 = vld [vmem:[%s247 + $0x68] sm:$0xff]
        %v288 = vld [vmem:[%s247 + $0x70] sm:$0xff]
        %v289 = vld [vmem:[%s1] sm:$0xff]
        %v290 = vld [vmem:[%s247] sm:$0xff]
        %v291 = vld [vmem:[%s247 + $0x8] sm:$0xff]
        %v292 = vld [vmem:[%s247 + $0x10] sm:$0xff]
        %v293 = vld [vmem:[%s247 + $0x18] sm:$0xff]
        %v294 = vld [vmem:[%s247 + $0x20] sm:$0xff]
        %v295 = vld [vmem:[%s247 + $0x28] sm:$0xff]
        %v296 = vld [vmem:[%s247 + $0x30] sm:$0xff]
        %v297 = vld [vmem:[%s247 + $0x38] sm:$0xff]
        %v298 = vld [vmem:[%s247 + $0x40] sm:$0xff]
        %v299 = vld [vmem:[%s247 + $0x48] sm:$0xff]
        %v300 = vld [vmem:[%s247 + $0x50] sm:$0xff]
        %v301 = vld [vmem:[%s247 + $0x58] sm:$0xff]
        %v302 = vld [vmem:[%s247 + $0x60] sm:$0xff]
        %v303 = vld [vmem:[%s247 + $0x68] sm:$0xff]
        %v304 = vld [vmem:[%s247 + $0x70] sm:$0xff]
        %v305 = vld [vmem:[%s247 + $0x78] sm:$0xff]
        %s306 = scalar_lea.vmem %s1, 8
        %v307 = vld [vmem:[%s306] sm:$0xff]
        %324 = vrot.lane.b32.xlu0 %v290, 127
        %v325 = vpop.permute.xlu0 %324
        %326 = vrot.lane.b32.xlu0 %v291, 127
        %v327 = vpop.permute.xlu0 %326
        %328 = vrot.lane.b32.xlu0 %v292, 127
        %v329 = vpop.permute.xlu0 %328
        %330 = vrot.lane.b32.xlu0 %v293, 127
        %v331 = vpop.permute.xlu0 %330
        %332 = vrot.lane.b32.xlu0 %v294, 127
        %v333 = vpop.permute.xlu0 %332
        %334 = vrot.lane.b32.xlu0 %v295, 127
        %v335 = vpop.permute.xlu0 %334
        %336 = vrot.lane.b32.xlu0 %v296, 127
        %v337 = vpop.permute.xlu0 %336
        %338 = vrot.lane.b32.xlu0 %v297, 127
        %v339 = vpop.permute.xlu0 %338
        %340 = vrot.lane.b32.xlu0 %v298, 127
        %v341 = vpop.permute.xlu0 %340
        %342 = vrot.lane.b32.xlu0 %v299, 127
        %v343 = vpop.permute.xlu0 %342
        %344 = vrot.lane.b32.xlu0 %v300, 127
        %v345 = vpop.permute.xlu0 %344
        %346 = vrot.lane.b32.xlu0 %v301, 127
        %v347 = vpop.permute.xlu0 %346
        %348 = vrot.lane.b32.xlu0 %v302, 127
        %v349 = vpop.permute.xlu0 %348
        %350 = vrot.lane.b32.xlu0 %v303, 127
        %v351 = vpop.permute.xlu0 %350
        %352 = vrot.lane.b32.xlu0 %v304, 127
        %v353 = vpop.permute.xlu0 %352
        %354 = vrot.lane.b32.xlu0 %v305, 127
        %v355 = vpop.permute.xlu0 %354
        %vm356 = vcmask 1039360
        %v357 = vsel %vm356, %v325, %v327
        %v358 = vsel %vm356, %v327, %v329
        %v359 = vsel %vm356, %v329, %v331
        %v360 = vsel %vm356, %v333, %v335
        %v361 = vsel %vm356, %v335, %v337
        %v362 = vsel %vm356, %v337, %v339
        %v363 = vsel %vm356, %v341, %v343
        %v364 = vsel %vm356, %v343, %v345
        %v365 = vsel %vm356, %v345, %v347
        %v366 = vsel %vm356, %v349, %v351
        %v367 = vsel %vm356, %v351, %v353
        %v368 = vsel %vm356, %v353, %v355
        %vm381 = vcmask 261120
        %v383 = vsel %vm381, %v307, 0
        %385 = vmatpush.msra.mxu0 0.0
        %386 = vmatpush.msra.mxu0 0.0
        %387 = vmatpush.msra.mxu0 0.0
        %388 = vmatpush.msra.mxu0 0.0
        %389 = vmatpush.msra.mxu0 0.0
        %390 = vmatpush.msra.mxu0 0.0
        %391 = vmatpush.msra.mxu0 0.0
        %392 = vmatpush.msra.mxu0 0.0
        %393 = vmatpush.msra.mxu0 0.0
        %394 = vmatpush.msra.mxu0 0.0
        %395 = vmatpush.msra.mxu0 0.0
        %396 = vmatpush.msra.mxu0 0.0
        %397 = vmatpush.msra.mxu0 %v366
        %398 = vmatpush.msra.mxu0 %v363
        %399 = vmatpush.msra.mxu0 %v360
        %400 = vmatpush.msra.mxu0 %v357
        %401 = vmatmul.f32.gmra.mxu0 %v383
        %v402 = vpop.f32.mrf.mxu0
        %v403 = vadd.f32 0.0, %v402
        %404 = vdwg.mxu0
        %405 = vmatpush.msra.mxu0 0.0
        %406 = vmatpush.msra.mxu0 0.0
        %407 = vmatpush.msra.mxu0 0.0
        %408 = vmatpush.msra.mxu0 0.0
        %409 = vmatpush.msra.mxu0 0.0
        %410 = vmatpush.msra.mxu0 0.0
        %411 = vmatpush.msra.mxu0 0.0
        %412 = vmatpush.msra.mxu0 0.0
        %413 = vmatpush.msra.mxu0 0.0
        %414 = vmatpush.msra.mxu0 0.0
        %415 = vmatpush.msra.mxu0 0.0
        %416 = vmatpush.msra.mxu0 0.0
        %417 = vmatpush.msra.mxu0 %v367
        %418 = vmatpush.msra.mxu0 %v364
        %419 = vmatpush.msra.mxu0 %v361
        %420 = vmatpush.msra.mxu0 %v358
        %421 = vmatmul.f32.gmra.mxu0 %v383
        %v422 = vpop.f32.mrf.mxu0
        %v423 = vadd.f32 0.0, %v422
        %424 = vdwg.mxu0
        %425 = vmatpush.msra.mxu0 0.0
        %426 = vmatpush.msra.mxu0 0.0
        %427 = vmatpush.msra.mxu0 0.0
        %428 = vmatpush.msra.mxu0 0.0
        %429 = vmatpush.msra.mxu0 0.0
        %430 = vmatpush.msra.mxu0 0.0
        %431 = vmatpush.msra.mxu0 0.0
        %432 = vmatpush.msra.mxu0 0.0
        %433 = vmatpush.msra.mxu0 0.0
        %434 = vmatpush.msra.mxu0 0.0
        %435 = vmatpush.msra.mxu0 0.0
        %436 = vmatpush.msra.mxu0 0.0
        %437 = vmatpush.msra.mxu0 %v368
        %438 = vmatpush.msra.mxu0 %v365
        %439 = vmatpush.msra.mxu0 %v362
        %440 = vmatpush.msra.mxu0 %v359
        %441 = vmatmul.f32.gmra.mxu0 %v383
        %v442 = vpop.f32.mrf.mxu0
        %v443 = vadd.f32 0.0, %v442
        %444 = vdwg.mxu0
        %v446 = vsel %vm381, %v289, 0
        %448 = vmatpush.msra.mxu0 0.0
        %449 = vmatpush.msra.mxu0 0.0
        %450 = vmatpush.msra.mxu0 0.0
        %451 = vmatpush.msra.mxu0 0.0
        %452 = vmatpush.msra.mxu0 0.0
        %453 = vmatpush.msra.mxu0 0.0
        %454 = vmatpush.msra.mxu0 0.0
        %455 = vmatpush.msra.mxu0 0.0
        %456 = vmatpush.msra.mxu0 0.0
        %457 = vmatpush.msra.mxu0 0.0
        %458 = vmatpush.msra.mxu0 0.0
        %459 = vmatpush.msra.mxu0 0.0
        %460 = vmatpush.msra.mxu0 %v286
        %461 = vmatpush.msra.mxu0 %v283
        %462 = vmatpush.msra.mxu0 %v280
        %463 = vmatpush.msra.mxu0 %v277
        %464 = vmatmul.f32.gmra.mxu0 %v446
        %v465 = vpop.f32.mrf.mxu0
        %v466 = vadd.f32 %v403, %v465
        %467 = vdwg.mxu0
        %468 = vmatpush.msra.mxu0 0.0
        %469 = vmatpush.msra.mxu0 0.0
        %470 = vmatpush.msra.mxu0 0.0
        %471 = vmatpush.msra.mxu0 0.0
        %472 = vmatpush.msra.mxu0 0.0
        %473 = vmatpush.msra.mxu0 0.0
        %474 = vmatpush.msra.mxu0 0.0
        %475 = vmatpush.msra.mxu0 0.0
        %476 = vmatpush.msra.mxu0 0.0
        %477 = vmatpush.msra.mxu0 0.0
        %478 = vmatpush.msra.mxu0 0.0
        %479 = vmatpush.msra.mxu0 0.0
        %480 = vmatpush.msra.mxu0 %v287
        %481 = vmatpush.msra.mxu0 %v284
        %482 = vmatpush.msra.mxu0 %v281
        %483 = vmatpush.msra.mxu0 %v278
        %484 = vmatmul.f32.gmra.mxu0 %v446
        %v485 = vpop.f32.mrf.mxu0
        %v486 = vadd.f32 %v423, %v485
        %487 = vdwg.mxu0
        %488 = vmatpush.msra.mxu0 0.0
        %489 = vmatpush.msra.mxu0 0.0
        %490 = vmatpush.msra.mxu0 0.0
        %491 = vmatpush.msra.mxu0 0.0
        %492 = vmatpush.msra.mxu0 0.0
        %493 = vmatpush.msra.mxu0 0.0
        %494 = vmatpush.msra.mxu0 0.0
        %495 = vmatpush.msra.mxu0 0.0
        %496 = vmatpush.msra.mxu0 0.0
        %497 = vmatpush.msra.mxu0 0.0
        %498 = vmatpush.msra.mxu0 0.0
        %499 = vmatpush.msra.mxu0 0.0
        %500 = vmatpush.msra.mxu0 %v288
        %501 = vmatpush.msra.mxu0 %v285
        %502 = vmatpush.msra.mxu0 %v282
        %503 = vmatpush.msra.mxu0 %v279
        %504 = vmatmul.f32.gmra.mxu0 %v446
        %v505 = vpop.f32.mrf.mxu0
        %v506 = vadd.f32 %v443, %v505
        %507 = vdwg.mxu0
        %s508 = scalar_lea.vmem %s1, 16
        %v509 = vld [vmem:[%s508] sm:$0xff]
        %510 = vrot.lane.b32.xlu0 %v290, 126
        %v511 = vpop.permute.xlu0 %510
        %512 = vrot.lane.b32.xlu0 %v291, 126
        %v513 = vpop.permute.xlu0 %512
        %514 = vrot.lane.b32.xlu0 %v292, 126
        %v515 = vpop.permute.xlu0 %514
        %516 = vrot.lane.b32.xlu0 %v293, 126
        %v517 = vpop.permute.xlu0 %516
        %518 = vrot.lane.b32.xlu0 %v294, 126
        %v519 = vpop.permute.xlu0 %518
        %520 = vrot.lane.b32.xlu0 %v295, 126
        %v521 = vpop.permute.xlu0 %520
        %522 = vrot.lane.b32.xlu0 %v296, 126
        %v523 = vpop.permute.xlu0 %522
        %524 = vrot.lane.b32.xlu0 %v297, 126
        %v525 = vpop.permute.xlu0 %524
        %526 = vrot.lane.b32.xlu0 %v298, 126
        %v527 = vpop.permute.xlu0 %526
        %528 = vrot.lane.b32.xlu0 %v299, 126
        %v529 = vpop.permute.xlu0 %528
        %530 = vrot.lane.b32.xlu0 %v300, 126
        %v531 = vpop.permute.xlu0 %530
        %532 = vrot.lane.b32.xlu0 %v301, 126
        %v533 = vpop.permute.xlu0 %532
        %534 = vrot.lane.b32.xlu0 %v302, 126
        %v535 = vpop.permute.xlu0 %534
        %536 = vrot.lane.b32.xlu0 %v303, 126
        %v537 = vpop.permute.xlu0 %536
        %538 = vrot.lane.b32.xlu0 %v304, 126
        %v539 = vpop.permute.xlu0 %538
        %540 = vrot.lane.b32.xlu0 %v305, 126
        %v541 = vpop.permute.xlu0 %540
        %vm542 = vcmask 1031168
        %v543 = vsel %vm542, %v511, %v513
        %v544 = vsel %vm542, %v513, %v515
        %v545 = vsel %vm542, %v515, %v517
        %v546 = vsel %vm542, %v519, %v521
        %v547 = vsel %vm542, %v521, %v523
        %v548 = vsel %vm542, %v523, %v525
        %v549 = vsel %vm542, %v527, %v529
        %v550 = vsel %vm542, %v529, %v531
        %v551 = vsel %vm542, %v531, %v533
        %v552 = vsel %vm542, %v535, %v537
        %v553 = vsel %vm542, %v537, %v539
        %v554 = vsel %vm542, %v539, %v541
        %v568 = vsel %vm381, %v509, 0
        %570 = vmatpush.msra.mxu0 0.0
        %571 = vmatpush.msra.mxu0 0.0
        %572 = vmatpush.msra.mxu0 0.0
        %573 = vmatpush.msra.mxu0 0.0
        %574 = vmatpush.msra.mxu0 0.0
        %575 = vmatpush.msra.mxu0 0.0
        %576 = vmatpush.msra.mxu0 0.0
        %577 = vmatpush.msra.mxu0 0.0
        %578 = vmatpush.msra.mxu0 0.0
        %579 = vmatpush.msra.mxu0 0.0
        %580 = vmatpush.msra.mxu0 0.0
        %581 = vmatpush.msra.mxu0 0.0
        %582 = vmatpush.msra.mxu0 %v552
        %583 = vmatpush.msra.mxu0 %v549
        %584 = vmatpush.msra.mxu0 %v546
        %585 = vmatpush.msra.mxu0 %v543
        %586 = vmatmul.f32.gmra.mxu0 %v568
        %v587 = vpop.f32.mrf.mxu0
        %v588 = vadd.f32 0.0, %v587
        %589 = vdwg.mxu0
        %590 = vmatpush.msra.mxu0 0.0
        %591 = vmatpush.msra.mxu0 0.0
        %592 = vmatpush.msra.mxu0 0.0
        %593 = vmatpush.msra.mxu0 0.0
        %594 = vmatpush.msra.mxu0 0.0
        %595 = vmatpush.msra.mxu0 0.0
        %596 = vmatpush.msra.mxu0 0.0
        %597 = vmatpush.msra.mxu0 0.0
        %598 = vmatpush.msra.mxu0 0.0
        %599 = vmatpush.msra.mxu0 0.0
        %600 = vmatpush.msra.mxu0 0.0
        %601 = vmatpush.msra.mxu0 0.0
        %602 = vmatpush.msra.mxu0 %v553
        %603 = vmatpush.msra.mxu0 %v550
        %604 = vmatpush.msra.mxu0 %v547
        %605 = vmatpush.msra.mxu0 %v544
        %606 = vmatmul.f32.gmra.mxu0 %v568
        %v607 = vpop.f32.mrf.mxu0
        %v608 = vadd.f32 0.0, %v607
        %609 = vdwg.mxu0
        %610 = vmatpush.msra.mxu0 0.0
        %611 = vmatpush.msra.mxu0 0.0
        %612 = vmatpush.msra.mxu0 0.0
        %613 = vmatpush.msra.mxu0 0.0
        %614 = vmatpush.msra.mxu0 0.0
        %615 = vmatpush.msra.mxu0 0.0
        %616 = vmatpush.msra.mxu0 0.0
        %617 = vmatpush.msra.mxu0 0.0
        %618 = vmatpush.msra.mxu0 0.0
        %619 = vmatpush.msra.mxu0 0.0
        %620 = vmatpush.msra.mxu0 0.0
        %621 = vmatpush.msra.mxu0 0.0
        %622 = vmatpush.msra.mxu0 %v554
        %623 = vmatpush.msra.mxu0 %v551
        %624 = vmatpush.msra.mxu0 %v548
        %625 = vmatpush.msra.mxu0 %v545
        %626 = vmatmul.f32.gmra.mxu0 %v568
        %v627 = vpop.f32.mrf.mxu0
        %v628 = vadd.f32 0.0, %v627
        %629 = vdwg.mxu0
        %v630 = vadd.f32 %v466, %v588
        %v631 = vadd.f32 %v486, %v608
        %v632 = vadd.f32 %v506, %v628
        %s633 = scalar_lea.vmem %s1, 24
        %v634 = vld [vmem:[%s633] sm:$0xff]
        %635 = vrot.lane.b32.xlu0 %v290, 110
        %v636 = vpop.permute.xlu0 %635
        %637 = vrot.lane.b32.xlu0 %v291, 110
        %v638 = vpop.permute.xlu0 %637
        %639 = vrot.lane.b32.xlu0 %v292, 110
        %v640 = vpop.permute.xlu0 %639
        %641 = vrot.lane.b32.xlu0 %v293, 110
        %v642 = vpop.permute.xlu0 %641
        %643 = vrot.lane.b32.xlu0 %v294, 110
        %v644 = vpop.permute.xlu0 %643
        %645 = vrot.lane.b32.xlu0 %v295, 110
        %v646 = vpop.permute.xlu0 %645
        %647 = vrot.lane.b32.xlu0 %v296, 110
        %v648 = vpop.permute.xlu0 %647
        %649 = vrot.lane.b32.xlu0 %v297, 110
        %v650 = vpop.permute.xlu0 %649
        %651 = vrot.lane.b32.xlu0 %v298, 110
        %v652 = vpop.permute.xlu0 %651
        %653 = vrot.lane.b32.xlu0 %v299, 110
        %v654 = vpop.permute.xlu0 %653
        %655 = vrot.lane.b32.xlu0 %v300, 110
        %v656 = vpop.permute.xlu0 %655
        %657 = vrot.lane.b32.xlu0 %v301, 110
        %v658 = vpop.permute.xlu0 %657
        %659 = vrot.lane.b32.xlu0 %v302, 110
        %v660 = vpop.permute.xlu0 %659
        %661 = vrot.lane.b32.xlu0 %v303, 110
        %v662 = vpop.permute.xlu0 %661
        %663 = vrot.lane.b32.xlu0 %v304, 110
        %v664 = vpop.permute.xlu0 %663
        %665 = vrot.lane.b32.xlu0 %v305, 110
        %v666 = vpop.permute.xlu0 %665
        %vm667 = vcmask 900096
        %v668 = vsel %vm667, %v636, %v638
        %v669 = vsel %vm667, %v638, %v640
        %v670 = vsel %vm667, %v640, %v642
        %v671 = vsel %vm667, %v644, %v646
        %v672 = vsel %vm667, %v646, %v648
        %v673 = vsel %vm667, %v648, %v650
        %v674 = vsel %vm667, %v652, %v654
        %v675 = vsel %vm667, %v654, %v656
        %v676 = vsel %vm667, %v656, %v658
        %v677 = vsel %vm667, %v660, %v662
        %v678 = vsel %vm667, %v662, %v664
        %v679 = vsel %vm667, %v664, %v666
        %v693 = vsel %vm381, %v634, 0
        %695 = vmatpush.msra.mxu0 0.0
        %696 = vmatpush.msra.mxu0 0.0
        %697 = vmatpush.msra.mxu0 0.0
        %698 = vmatpush.msra.mxu0 0.0
        %699 = vmatpush.msra.mxu0 0.0
        %700 = vmatpush.msra.mxu0 0.0
        %701 = vmatpush.msra.mxu0 0.0
        %702 = vmatpush.msra.mxu0 0.0
        %703 = vmatpush.msra.mxu0 0.0
        %704 = vmatpush.msra.mxu0 0.0
        %705 = vmatpush.msra.mxu0 0.0
        %706 = vmatpush.msra.mxu0 0.0
        %707 = vmatpush.msra.mxu0 %v677
        %708 = vmatpush.msra.mxu0 %v674
        %709 = vmatpush.msra.mxu0 %v671
        %710 = vmatpush.msra.mxu0 %v668
        %711 = vmatmul.f32.gmra.mxu0 %v693
        %v712 = vpop.f32.mrf.mxu0
        %v713 = vadd.f32 0.0, %v712
        %714 = vdwg.mxu0
        %715 = vmatpush.msra.mxu0 0.0
        %716 = vmatpush.msra.mxu0 0.0
        %717 = vmatpush.msra.mxu0 0.0
        %718 = vmatpush.msra.mxu0 0.0
        %719 = vmatpush.msra.mxu0 0.0
        %720 = vmatpush.msra.mxu0 0.0
        %721 = vmatpush.msra.mxu0 0.0
        %722 = vmatpush.msra.mxu0 0.0
        %723 = vmatpush.msra.mxu0 0.0
        %724 = vmatpush.msra.mxu0 0.0
        %725 = vmatpush.msra.mxu0 0.0
        %726 = vmatpush.msra.mxu0 0.0
        %727 = vmatpush.msra.mxu0 %v678
        %728 = vmatpush.msra.mxu0 %v675
        %729 = vmatpush.msra.mxu0 %v672
        %730 = vmatpush.msra.mxu0 %v669
        %731 = vmatmul.f32.gmra.mxu0 %v693
        %v732 = vpop.f32.mrf.mxu0
        %v733 = vadd.f32 0.0, %v732
        %734 = vdwg.mxu0
        %735 = vmatpush.msra.mxu0 0.0
        %736 = vmatpush.msra.mxu0 0.0
        %737 = vmatpush.msra.mxu0 0.0
        %738 = vmatpush.msra.mxu0 0.0
        %739 = vmatpush.msra.mxu0 0.0
        %740 = vmatpush.msra.mxu0 0.0
        %741 = vmatpush.msra.mxu0 0.0
        %742 = vmatpush.msra.mxu0 0.0
        %743 = vmatpush.msra.mxu0 0.0
        %744 = vmatpush.msra.mxu0 0.0
        %745 = vmatpush.msra.mxu0 0.0
        %746 = vmatpush.msra.mxu0 0.0
        %747 = vmatpush.msra.mxu0 %v679
        %748 = vmatpush.msra.mxu0 %v676
        %749 = vmatpush.msra.mxu0 %v673
        %750 = vmatpush.msra.mxu0 %v670
        %751 = vmatmul.f32.gmra.mxu0 %v693
        %v752 = vpop.f32.mrf.mxu0
        %v753 = vadd.f32 0.0, %v752
        %754 = vdwg.mxu0
        %v755 = vadd.f32 %v630, %v713
        %v756 = vadd.f32 %v631, %v733
        %v757 = vadd.f32 %v632, %v753
        %s758 = scalar_lea.vmem %s1, 32
        %v759 = vld [vmem:[%s758] sm:$0xff]
        %760 = vrot.lane.b32.xlu0 %v290, 109
        %v761 = vpop.permute.xlu0 %760
        %762 = vrot.lane.b32.xlu0 %v291, 109
        %v763 = vpop.permute.xlu0 %762
        %764 = vrot.lane.b32.xlu0 %v292, 109
        %v765 = vpop.permute.xlu0 %764
        %766 = vrot.lane.b32.xlu0 %v293, 109
        %v767 = vpop.permute.xlu0 %766
        %768 = vrot.lane.b32.xlu0 %v294, 109
        %v769 = vpop.permute.xlu0 %768
        %770 = vrot.lane.b32.xlu0 %v295, 109
        %v771 = vpop.permute.xlu0 %770
        %772 = vrot.lane.b32.xlu0 %v296, 109
        %v773 = vpop.permute.xlu0 %772
        %774 = vrot.lane.b32.xlu0 %v297, 109
        %v775 = vpop.permute.xlu0 %774
        %776 = vrot.lane.b32.xlu0 %v298, 109
        %v777 = vpop.permute.xlu0 %776
        %778 = vrot.lane.b32.xlu0 %v299, 109
        %v779 = vpop.permute.xlu0 %778
        %780 = vrot.lane.b32.xlu0 %v300, 109
        %v781 = vpop.permute.xlu0 %780
        %782 = vrot.lane.b32.xlu0 %v301, 109
        %v783 = vpop.permute.xlu0 %782
        %784 = vrot.lane.b32.xlu0 %v302, 109
        %v785 = vpop.permute.xlu0 %784
        %786 = vrot.lane.b32.xlu0 %v303, 109
        %v787 = vpop.permute.xlu0 %786
        %788 = vrot.lane.b32.xlu0 %v304, 109
        %v789 = vpop.permute.xlu0 %788
        %790 = vrot.lane.b32.xlu0 %v305, 109
        %v791 = vpop.permute.xlu0 %790
        %vm792 = vcmask 891904
        %v793 = vsel %vm792, %v761, %v763
        %v794 = vsel %vm792, %v763, %v765
        %v795 = vsel %vm792, %v765, %v767
        %v796 = vsel %vm792, %v769, %v771
        %v797 = vsel %vm792, %v771, %v773
        %v798 = vsel %vm792, %v773, %v775
        %v799 = vsel %vm792, %v777, %v779
        %v800 = vsel %vm792, %v779, %v781
        %v801 = vsel %vm792, %v781, %v783
        %v802 = vsel %vm792, %v785, %v787
        %v803 = vsel %vm792, %v787, %v789
        %v804 = vsel %vm792, %v789, %v791
        %v818 = vsel %vm381, %v759, 0
        %820 = vmatpush.msra.mxu0 0.0
        %821 = vmatpush.msra.mxu0 0.0
        %822 = vmatpush.msra.mxu0 0.0
        %823 = vmatpush.msra.mxu0 0.0
        %824 = vmatpush.msra.mxu0 0.0
        %825 = vmatpush.msra.mxu0 0.0
        %826 = vmatpush.msra.mxu0 0.0
        %827 = vmatpush.msra.mxu0 0.0
        %828 = vmatpush.msra.mxu0 0.0
        %829 = vmatpush.msra.mxu0 0.0
        %830 = vmatpush.msra.mxu0 0.0
        %831 = vmatpush.msra.mxu0 0.0
        %832 = vmatpush.msra.mxu0 %v802
        %833 = vmatpush.msra.mxu0 %v799
        %834 = vmatpush.msra.mxu0 %v796
        %835 = vmatpush.msra.mxu0 %v793
        %836 = vmatmul.f32.gmra.mxu0 %v818
        %v837 = vpop.f32.mrf.mxu0
        %v838 = vadd.f32 0.0, %v837
        %839 = vdwg.mxu0
        %840 = vmatpush.msra.mxu0 0.0
        %841 = vmatpush.msra.mxu0 0.0
        %842 = vmatpush.msra.mxu0 0.0
        %843 = vmatpush.msra.mxu0 0.0
        %844 = vmatpush.msra.mxu0 0.0
        %845 = vmatpush.msra.mxu0 0.0
        %846 = vmatpush.msra.mxu0 0.0
        %847 = vmatpush.msra.mxu0 0.0
        %848 = vmatpush.msra.mxu0 0.0
        %849 = vmatpush.msra.mxu0 0.0
        %850 = vmatpush.msra.mxu0 0.0
        %851 = vmatpush.msra.mxu0 0.0
        %852 = vmatpush.msra.mxu0 %v803
        %853 = vmatpush.msra.mxu0 %v800
        %854 = vmatpush.msra.mxu0 %v797
        %855 = vmatpush.msra.mxu0 %v794
        %856 = vmatmul.f32.gmra.mxu0 %v818
        %v857 = vpop.f32.mrf.mxu0
        %v858 = vadd.f32 0.0, %v857
        %859 = vdwg.mxu0
        %860 = vmatpush.msra.mxu0 0.0
        %861 = vmatpush.msra.mxu0 0.0
        %862 = vmatpush.msra.mxu0 0.0
        %863 = vmatpush.msra.mxu0 0.0
        %864 = vmatpush.msra.mxu0 0.0
        %865 = vmatpush.msra.mxu0 0.0
        %866 = vmatpush.msra.mxu0 0.0
        %867 = vmatpush.msra.mxu0 0.0
        %868 = vmatpush.msra.mxu0 0.0
        %869 = vmatpush.msra.mxu0 0.0
        %870 = vmatpush.msra.mxu0 0.0
        %871 = vmatpush.msra.mxu0 0.0
        %872 = vmatpush.msra.mxu0 %v804
        %873 = vmatpush.msra.mxu0 %v801
        %874 = vmatpush.msra.mxu0 %v798
        %875 = vmatpush.msra.mxu0 %v795
        %876 = vmatmul.f32.gmra.mxu0 %v818
        %v877 = vpop.f32.mrf.mxu0
        %v878 = vadd.f32 0.0, %v877
        %879 = vdwg.mxu0
        %v880 = vadd.f32 %v755, %v838
        %v881 = vadd.f32 %v756, %v858
        %v882 = vadd.f32 %v757, %v878
        %s883 = scalar_lea.vmem %s1, 40
        %v884 = vld [vmem:[%s883] sm:$0xff]
        %885 = vrot.lane.b32.xlu0 %v290, 108
        %v886 = vpop.permute.xlu0 %885
        %887 = vrot.lane.b32.xlu0 %v291, 108
        %v888 = vpop.permute.xlu0 %887
        %889 = vrot.lane.b32.xlu0 %v292, 108
        %v890 = vpop.permute.xlu0 %889
        %891 = vrot.lane.b32.xlu0 %v293, 108
        %v892 = vpop.permute.xlu0 %891
        %893 = vrot.lane.b32.xlu0 %v294, 108
        %v894 = vpop.permute.xlu0 %893
        %895 = vrot.lane.b32.xlu0 %v295, 108
        %v896 = vpop.permute.xlu0 %895
        %897 = vrot.lane.b32.xlu0 %v296, 108
        %v898 = vpop.permute.xlu0 %897
        %899 = vrot.lane.b32.xlu0 %v297, 108
        %v900 = vpop.permute.xlu0 %899
        %901 = vrot.lane.b32.xlu0 %v298, 108
        %v902 = vpop.permute.xlu0 %901
        %903 = vrot.lane.b32.xlu0 %v299, 108
        %v904 = vpop.permute.xlu0 %903
        %905 = vrot.lane.b32.xlu0 %v300, 108
        %v906 = vpop.permute.xlu0 %905
        %907 = vrot.lane.b32.xlu0 %v301, 108
        %v908 = vpop.permute.xlu0 %907
        %909 = vrot.lane.b32.xlu0 %v302, 108
        %v910 = vpop.permute.xlu0 %909
        %911 = vrot.lane.b32.xlu0 %v303, 108
        %v912 = vpop.permute.xlu0 %911
        %913 = vrot.lane.b32.xlu0 %v304, 108
        %v914 = vpop.permute.xlu0 %913
        %915 = vrot.lane.b32.xlu0 %v305, 108
        %v916 = vpop.permute.xlu0 %915
        %vm917 = vcmask 883712
        %v918 = vsel %vm917, %v886, %v888
        %v919 = vsel %vm917, %v888, %v890
        %v920 = vsel %vm917, %v890, %v892
        %v921 = vsel %vm917, %v894, %v896
        %v922 = vsel %vm917, %v896, %v898
        %v923 = vsel %vm917, %v898, %v900
        %v924 = vsel %vm917, %v902, %v904
        %v925 = vsel %vm917, %v904, %v906
        %v926 = vsel %vm917, %v906, %v908
        %v927 = vsel %vm917, %v910, %v912
        %v928 = vsel %vm917, %v912, %v914
        %v929 = vsel %vm917, %v914, %v916
        %v943 = vsel %vm381, %v884, 0
        %945 = vmatpush.msra.mxu0 0.0
        %946 = vmatpush.msra.mxu0 0.0
        %947 = vmatpush.msra.mxu0 0.0
        %948 = vmatpush.msra.mxu0 0.0
        %949 = vmatpush.msra.mxu0 0.0
        %950 = vmatpush.msra.mxu0 0.0
        %951 = vmatpush.msra.mxu0 0.0
        %952 = vmatpush.msra.mxu0 0.0
        %953 = vmatpush.msra.mxu0 0.0
        %954 = vmatpush.msra.mxu0 0.0
        %955 = vmatpush.msra.mxu0 0.0
        %956 = vmatpush.msra.mxu0 0.0
        %957 = vmatpush.msra.mxu0 %v927
        %958 = vmatpush.msra.mxu0 %v924
        %959 = vmatpush.msra.mxu0 %v921
        %960 = vmatpush.msra.mxu0 %v918
        %961 = vmatmul.f32.gmra.mxu0 %v943
        %v962 = vpop.f32.mrf.mxu0
        %v963 = vadd.f32 0.0, %v962
        %964 = vdwg.mxu0
        %965 = vmatpush.msra.mxu0 0.0
        %966 = vmatpush.msra.mxu0 0.0
        %967 = vmatpush.msra.mxu0 0.0
        %968 = vmatpush.msra.mxu0 0.0
        %969 = vmatpush.msra.mxu0 0.0
        %970 = vmatpush.msra.mxu0 0.0
        %971 = vmatpush.msra.mxu0 0.0
        %972 = vmatpush.msra.mxu0 0.0
        %973 = vmatpush.msra.mxu0 0.0
        %974 = vmatpush.msra.mxu0 0.0
        %975 = vmatpush.msra.mxu0 0.0
        %976 = vmatpush.msra.mxu0 0.0
        %977 = vmatpush.msra.mxu0 %v928
        %978 = vmatpush.msra.mxu0 %v925
        %979 = vmatpush.msra.mxu0 %v922
        %980 = vmatpush.msra.mxu0 %v919
        %981 = vmatmul.f32.gmra.mxu0 %v943
        %v982 = vpop.f32.mrf.mxu0
        %v983 = vadd.f32 0.0, %v982
        %984 = vdwg.mxu0
        %985 = vmatpush.msra.mxu0 0.0
        %986 = vmatpush.msra.mxu0 0.0
        %987 = vmatpush.msra.mxu0 0.0
        %988 = vmatpush.msra.mxu0 0.0
        %989 = vmatpush.msra.mxu0 0.0
        %990 = vmatpush.msra.mxu0 0.0
        %991 = vmatpush.msra.mxu0 0.0
        %992 = vmatpush.msra.mxu0 0.0
        %993 = vmatpush.msra.mxu0 0.0
        %994 = vmatpush.msra.mxu0 0.0
        %995 = vmatpush.msra.mxu0 0.0
        %996 = vmatpush.msra.mxu0 0.0
        %997 = vmatpush.msra.mxu0 %v929
        %998 = vmatpush.msra.mxu0 %v926
        %999 = vmatpush.msra.mxu0 %v923
        %1000 = vmatpush.msra.mxu0 %v920
        %1001 = vmatmul.f32.gmra.mxu0 %v943
        %v1002 = vpop.f32.mrf.mxu0
        %v1003 = vadd.f32 0.0, %v1002
        %1004 = vdwg.mxu0
        %v1005 = vadd.f32 %v880, %v963
        %v1006 = vadd.f32 %v881, %v983
        %v1007 = vadd.f32 %v882, %v1003
        %s1008 = scalar_lea.vmem %s1, 48
        %v1009 = vld [vmem:[%s1008] sm:$0xff]
        %1010 = vrot.lane.b32.xlu0 %v290, 92
        %v1011 = vpop.permute.xlu0 %1010
        %1012 = vrot.lane.b32.xlu0 %v291, 92
        %v1013 = vpop.permute.xlu0 %1012
        %1014 = vrot.lane.b32.xlu0 %v292, 92
        %v1015 = vpop.permute.xlu0 %1014
        %1016 = vrot.lane.b32.xlu0 %v293, 92
        %v1017 = vpop.permute.xlu0 %1016
        %1018 = vrot.lane.b32.xlu0 %v294, 92
        %v1019 = vpop.permute.xlu0 %1018
        %1020 = vrot.lane.b32.xlu0 %v295, 92
        %v1021 = vpop.permute.xlu0 %1020
        %1022 = vrot.lane.b32.xlu0 %v296, 92
        %v1023 = vpop.permute.xlu0 %1022
        %1024 = vrot.lane.b32.xlu0 %v297, 92
        %v1025 = vpop.permute.xlu0 %1024
        %1026 = vrot.lane.b32.xlu0 %v298, 92
        %v1027 = vpop.permute.xlu0 %1026
        %1028 = vrot.lane.b32.xlu0 %v299, 92
        %v1029 = vpop.permute.xlu0 %1028
        %1030 = vrot.lane.b32.xlu0 %v300, 92
        %v1031 = vpop.permute.xlu0 %1030
        %1032 = vrot.lane.b32.xlu0 %v301, 92
        %v1033 = vpop.permute.xlu0 %1032
        %1034 = vrot.lane.b32.xlu0 %v302, 92
        %v1035 = vpop.permute.xlu0 %1034
        %1036 = vrot.lane.b32.xlu0 %v303, 92
        %v1037 = vpop.permute.xlu0 %1036
        %1038 = vrot.lane.b32.xlu0 %v304, 92
        %v1039 = vpop.permute.xlu0 %1038
        %1040 = vrot.lane.b32.xlu0 %v305, 92
        %v1041 = vpop.permute.xlu0 %1040
        %vm1042 = vcmask 752640
        %v1043 = vsel %vm1042, %v1011, %v1013
        %v1044 = vsel %vm1042, %v1013, %v1015
        %v1045 = vsel %vm1042, %v1015, %v1017
        %v1046 = vsel %vm1042, %v1019, %v1021
        %v1047 = vsel %vm1042, %v1021, %v1023
        %v1048 = vsel %vm1042, %v1023, %v1025
        %v1049 = vsel %vm1042, %v1027, %v1029
        %v1050 = vsel %vm1042, %v1029, %v1031
        %v1051 = vsel %vm1042, %v1031, %v1033
        %v1052 = vsel %vm1042, %v1035, %v1037
        %v1053 = vsel %vm1042, %v1037, %v1039
        %v1054 = vsel %vm1042, %v1039, %v1041
        %v1068 = vsel %vm381, %v1009, 0
        %1070 = vmatpush.msra.mxu0 0.0
        %1071 = vmatpush.msra.mxu0 0.0
        %1072 = vmatpush.msra.mxu0 0.0
        %1073 = vmatpush.msra.mxu0 0.0
        %1074 = vmatpush.msra.mxu0 0.0
        %1075 = vmatpush.msra.mxu0 0.0
        %1076 = vmatpush.msra.mxu0 0.0
        %1077 = vmatpush.msra.mxu0 0.0
        %1078 = vmatpush.msra.mxu0 0.0
        %1079 = vmatpush.msra.mxu0 0.0
        %1080 = vmatpush.msra.mxu0 0.0
        %1081 = vmatpush.msra.mxu0 0.0
        %1082 = vmatpush.msra.mxu0 %v1052
        %1083 = vmatpush.msra.mxu0 %v1049
        %1084 = vmatpush.msra.mxu0 %v1046
        %1085 = vmatpush.msra.mxu0 %v1043
        %1086 = vmatmul.f32.gmra.mxu0 %v1068
        %v1087 = vpop.f32.mrf.mxu0
        %v1088 = vadd.f32 0.0, %v1087
        %1089 = vdwg.mxu0
        %1090 = vmatpush.msra.mxu0 0.0
        %1091 = vmatpush.msra.mxu0 0.0
        %1092 = vmatpush.msra.mxu0 0.0
        %1093 = vmatpush.msra.mxu0 0.0
        %1094 = vmatpush.msra.mxu0 0.0
        %1095 = vmatpush.msra.mxu0 0.0
        %1096 = vmatpush.msra.mxu0 0.0
        %1097 = vmatpush.msra.mxu0 0.0
        %1098 = vmatpush.msra.mxu0 0.0
        %1099 = vmatpush.msra.mxu0 0.0
        %1100 = vmatpush.msra.mxu0 0.0
        %1101 = vmatpush.msra.mxu0 0.0
        %1102 = vmatpush.msra.mxu0 %v1053
        %1103 = vmatpush.msra.mxu0 %v1050
        %1104 = vmatpush.msra.mxu0 %v1047
        %1105 = vmatpush.msra.mxu0 %v1044
        %1106 = vmatmul.f32.gmra.mxu0 %v1068
        %v1107 = vpop.f32.mrf.mxu0
        %v1108 = vadd.f32 0.0, %v1107
        %1109 = vdwg.mxu0
        %1110 = vmatpush.msra.mxu0 0.0
        %1111 = vmatpush.msra.mxu0 0.0
        %1112 = vmatpush.msra.mxu0 0.0
        %1113 = vmatpush.msra.mxu0 0.0
        %1114 = vmatpush.msra.mxu0 0.0
        %1115 = vmatpush.msra.mxu0 0.0
        %1116 = vmatpush.msra.mxu0 0.0
        %1117 = vmatpush.msra.mxu0 0.0
        %1118 = vmatpush.msra.mxu0 0.0
        %1119 = vmatpush.msra.mxu0 0.0
        %1120 = vmatpush.msra.mxu0 0.0
        %1121 = vmatpush.msra.mxu0 0.0
        %1122 = vmatpush.msra.mxu0 %v1054
        %1123 = vmatpush.msra.mxu0 %v1051
        %1124 = vmatpush.msra.mxu0 %v1048
        %1125 = vmatpush.msra.mxu0 %v1045
        %1126 = vmatmul.f32.gmra.mxu0 %v1068
        %v1127 = vpop.f32.mrf.mxu0
        %v1128 = vadd.f32 0.0, %v1127
        %1129 = vdwg.mxu0
        %v1130 = vadd.f32 %v1005, %v1088
        %v1131 = vadd.f32 %v1006, %v1108
        %v1132 = vadd.f32 %v1007, %v1128
        %s1133 = scalar_lea.vmem %s1, 56
        %v1134 = vld [vmem:[%s1133] sm:$0xff]
        %1135 = vrot.lane.b32.xlu0 %v290, 91
        %v1136 = vpop.permute.xlu0 %1135
        %1137 = vrot.lane.b32.xlu0 %v291, 91
        %v1138 = vpop.permute.xlu0 %1137
        %1139 = vrot.lane.b32.xlu0 %v292, 91
        %v1140 = vpop.permute.xlu0 %1139
        %1141 = vrot.lane.b32.xlu0 %v293, 91
        %v1142 = vpop.permute.xlu0 %1141
        %1143 = vrot.lane.b32.xlu0 %v294, 91
        %v1144 = vpop.permute.xlu0 %1143
        %1145 = vrot.lane.b32.xlu0 %v295, 91
        %v1146 = vpop.permute.xlu0 %1145
        %1147 = vrot.lane.b32.xlu0 %v296, 91
        %v1148 = vpop.permute.xlu0 %1147
        %1149 = vrot.lane.b32.xlu0 %v297, 91
        %v1150 = vpop.permute.xlu0 %1149
        %1151 = vrot.lane.b32.xlu0 %v298, 91
        %v1152 = vpop.permute.xlu0 %1151
        %1153 = vrot.lane.b32.xlu0 %v299, 91
        %v1154 = vpop.permute.xlu0 %1153
        %1155 = vrot.lane.b32.xlu0 %v300, 91
        %v1156 = vpop.permute.xlu0 %1155
        %1157 = vrot.lane.b32.xlu0 %v301, 91
        %v1158 = vpop.permute.xlu0 %1157
        %1159 = vrot.lane.b32.xlu0 %v302, 91
        %v1160 = vpop.permute.xlu0 %1159
        %1161 = vrot.lane.b32.xlu0 %v303, 91
        %v1162 = vpop.permute.xlu0 %1161
        %1163 = vrot.lane.b32.xlu0 %v304, 91
        %v1164 = vpop.permute.xlu0 %1163
        %1165 = vrot.lane.b32.xlu0 %v305, 91
        %v1166 = vpop.permute.xlu0 %1165
        %vm1167 = vcmask 744448
        %v1168 = vsel %vm1167, %v1136, %v1138
        %v1169 = vsel %vm1167, %v1138, %v1140
        %v1170 = vsel %vm1167, %v1140, %v1142
        %v1171 = vsel %vm1167, %v1144, %v1146
        %v1172 = vsel %vm1167, %v1146, %v1148
        %v1173 = vsel %vm1167, %v1148, %v1150
        %v1174 = vsel %vm1167, %v1152, %v1154
        %v1175 = vsel %vm1167, %v1154, %v1156
        %v1176 = vsel %vm1167, %v1156, %v1158
        %v1177 = vsel %vm1167, %v1160, %v1162
        %v1178 = vsel %vm1167, %v1162, %v1164
        %v1179 = vsel %vm1167, %v1164, %v1166
        %v1193 = vsel %vm381, %v1134, 0
        %1195 = vmatpush.msra.mxu0 0.0
        %1196 = vmatpush.msra.mxu0 0.0
        %1197 = vmatpush.msra.mxu0 0.0
        %1198 = vmatpush.msra.mxu0 0.0
        %1199 = vmatpush.msra.mxu0 0.0
        %1200 = vmatpush.msra.mxu0 0.0
        %1201 = vmatpush.msra.mxu0 0.0
        %1202 = vmatpush.msra.mxu0 0.0
        %1203 = vmatpush.msra.mxu0 0.0
        %1204 = vmatpush.msra.mxu0 0.0
        %1205 = vmatpush.msra.mxu0 0.0
        %1206 = vmatpush.msra.mxu0 0.0
        %1207 = vmatpush.msra.mxu0 %v1177
        %1208 = vmatpush.msra.mxu0 %v1174
        %1209 = vmatpush.msra.mxu0 %v1171
        %1210 = vmatpush.msra.mxu0 %v1168
        %1211 = vmatmul.f32.gmra.mxu0 %v1193
        %v1212 = vpop.f32.mrf.mxu0
        %v1213 = vadd.f32 0.0, %v1212
        %1214 = vdwg.mxu0
        %1215 = vmatpush.msra.mxu0 0.0
        %1216 = vmatpush.msra.mxu0 0.0
        %1217 = vmatpush.msra.mxu0 0.0
        %1218 = vmatpush.msra.mxu0 0.0
        %1219 = vmatpush.msra.mxu0 0.0
        %1220 = vmatpush.msra.mxu0 0.0
        %1221 = vmatpush.msra.mxu0 0.0
        %1222 = vmatpush.msra.mxu0 0.0
        %1223 = vmatpush.msra.mxu0 0.0
        %1224 = vmatpush.msra.mxu0 0.0
        %1225 = vmatpush.msra.mxu0 0.0
        %1226 = vmatpush.msra.mxu0 0.0
        %1227 = vmatpush.msra.mxu0 %v1178
        %1228 = vmatpush.msra.mxu0 %v1175
        %1229 = vmatpush.msra.mxu0 %v1172
        %1230 = vmatpush.msra.mxu0 %v1169
        %1231 = vmatmul.f32.gmra.mxu0 %v1193
        %v1232 = vpop.f32.mrf.mxu0
        %v1233 = vadd.f32 0.0, %v1232
        %1234 = vdwg.mxu0
        %1235 = vmatpush.msra.mxu0 0.0
        %1236 = vmatpush.msra.mxu0 0.0
        %1237 = vmatpush.msra.mxu0 0.0
        %1238 = vmatpush.msra.mxu0 0.0
        %1239 = vmatpush.msra.mxu0 0.0
        %1240 = vmatpush.msra.mxu0 0.0
        %1241 = vmatpush.msra.mxu0 0.0
        %1242 = vmatpush.msra.mxu0 0.0
        %1243 = vmatpush.msra.mxu0 0.0
        %1244 = vmatpush.msra.mxu0 0.0
        %1245 = vmatpush.msra.mxu0 0.0
        %1246 = vmatpush.msra.mxu0 0.0
        %1247 = vmatpush.msra.mxu0 %v1179
        %1248 = vmatpush.msra.mxu0 %v1176
        %1249 = vmatpush.msra.mxu0 %v1173
        %1250 = vmatpush.msra.mxu0 %v1170
        %1251 = vmatmul.f32.gmra.mxu0 %v1193
        %v1252 = vpop.f32.mrf.mxu0
        %v1253 = vadd.f32 0.0, %v1252
        %1254 = vdwg.mxu0
        %v1255 = vadd.f32 %v1130, %v1213
        %v1256 = vadd.f32 %v1131, %v1233
        %v1257 = vadd.f32 %v1132, %v1253
        %s1258 = scalar_lea.vmem %s1, 64
        %v1259 = vld [vmem:[%s1258] sm:$0xff]
        %1260 = vrot.lane.b32.xlu0 %v290, 90
        %v1261 = vpop.permute.xlu0 %1260
        %1262 = vrot.lane.b32.xlu0 %v291, 90
        %v1263 = vpop.permute.xlu0 %1262
        %1264 = vrot.lane.b32.xlu0 %v292, 90
        %v1265 = vpop.permute.xlu0 %1264
        %1266 = vrot.lane.b32.xlu0 %v293, 90
        %v1267 = vpop.permute.xlu0 %1266
        %1268 = vrot.lane.b32.xlu0 %v294, 90
        %v1269 = vpop.permute.xlu0 %1268
        %1270 = vrot.lane.b32.xlu0 %v295, 90
        %v1271 = vpop.permute.xlu0 %1270
        %1272 = vrot.lane.b32.xlu0 %v296, 90
        %v1273 = vpop.permute.xlu0 %1272
        %1274 = vrot.lane.b32.xlu0 %v297, 90
        %v1275 = vpop.permute.xlu0 %1274
        %1276 = vrot.lane.b32.xlu0 %v298, 90
        %v1277 = vpop.permute.xlu0 %1276
        %1278 = vrot.lane.b32.xlu0 %v299, 90
        %v1279 = vpop.permute.xlu0 %1278
        %1280 = vrot.lane.b32.xlu0 %v300, 90
        %v1281 = vpop.permute.xlu0 %1280
        %1282 = vrot.lane.b32.xlu0 %v301, 90
        %v1283 = vpop.permute.xlu0 %1282
        %1284 = vrot.lane.b32.xlu0 %v302, 90
        %v1285 = vpop.permute.xlu0 %1284
        %1286 = vrot.lane.b32.xlu0 %v303, 90
        %v1287 = vpop.permute.xlu0 %1286
        %1288 = vrot.lane.b32.xlu0 %v304, 90
        %v1289 = vpop.permute.xlu0 %1288
        %1290 = vrot.lane.b32.xlu0 %v305, 90
        %v1291 = vpop.permute.xlu0 %1290
        %vm1292 = vcmask 736256
        %v1293 = vsel %vm1292, %v1261, %v1263
        %v1294 = vsel %vm1292, %v1263, %v1265
        %v1295 = vsel %vm1292, %v1265, %v1267
        %v1296 = vsel %vm1292, %v1269, %v1271
        %v1297 = vsel %vm1292, %v1271, %v1273
        %v1298 = vsel %vm1292, %v1273, %v1275
        %v1299 = vsel %vm1292, %v1277, %v1279
        %v1300 = vsel %vm1292, %v1279, %v1281
        %v1301 = vsel %vm1292, %v1281, %v1283
        %v1302 = vsel %vm1292, %v1285, %v1287
        %v1303 = vsel %vm1292, %v1287, %v1289
        %v1304 = vsel %vm1292, %v1289, %v1291
        %v1318 = vsel %vm381, %v1259, 0
        %1320 = vmatpush.msra.mxu0 0.0
        %1321 = vmatpush.msra.mxu0 0.0
        %1322 = vmatpush.msra.mxu0 0.0
        %1323 = vmatpush.msra.mxu0 0.0
        %1324 = vmatpush.msra.mxu0 0.0
        %1325 = vmatpush.msra.mxu0 0.0
        %1326 = vmatpush.msra.mxu0 0.0
        %1327 = vmatpush.msra.mxu0 0.0
        %1328 = vmatpush.msra.mxu0 0.0
        %1329 = vmatpush.msra.mxu0 0.0
        %1330 = vmatpush.msra.mxu0 0.0
        %1331 = vmatpush.msra.mxu0 0.0
        %1332 = vmatpush.msra.mxu0 %v1302
        %1333 = vmatpush.msra.mxu0 %v1299
        %1334 = vmatpush.msra.mxu0 %v1296
        %1335 = vmatpush.msra.mxu0 %v1293
        %1336 = vmatmul.f32.gmra.mxu0 %v1318
        %v1337 = vpop.f32.mrf.mxu0
        %v1338 = vadd.f32 0.0, %v1337
        %1339 = vdwg.mxu0
        %1340 = vmatpush.msra.mxu0 0.0
        %1341 = vmatpush.msra.mxu0 0.0
        %1342 = vmatpush.msra.mxu0 0.0
        %1343 = vmatpush.msra.mxu0 0.0
        %1344 = vmatpush.msra.mxu0 0.0
        %1345 = vmatpush.msra.mxu0 0.0
        %1346 = vmatpush.msra.mxu0 0.0
        %1347 = vmatpush.msra.mxu0 0.0
        %1348 = vmatpush.msra.mxu0 0.0
        %1349 = vmatpush.msra.mxu0 0.0
        %1350 = vmatpush.msra.mxu0 0.0
        %1351 = vmatpush.msra.mxu0 0.0
        %1352 = vmatpush.msra.mxu0 %v1303
        %1353 = vmatpush.msra.mxu0 %v1300
        %1354 = vmatpush.msra.mxu0 %v1297
        %1355 = vmatpush.msra.mxu0 %v1294
        %1356 = vmatmul.f32.gmra.mxu0 %v1318
        %v1357 = vpop.f32.mrf.mxu0
        %v1358 = vadd.f32 0.0, %v1357
        %1359 = vdwg.mxu0
        %1360 = vmatpush.msra.mxu0 0.0
        %1361 = vmatpush.msra.mxu0 0.0
        %1362 = vmatpush.msra.mxu0 0.0
        %1363 = vmatpush.msra.mxu0 0.0
        %1364 = vmatpush.msra.mxu0 0.0
        %1365 = vmatpush.msra.mxu0 0.0
        %1366 = vmatpush.msra.mxu0 0.0
        %1367 = vmatpush.msra.mxu0 0.0
        %1368 = vmatpush.msra.mxu0 0.0
        %1369 = vmatpush.msra.mxu0 0.0
        %1370 = vmatpush.msra.mxu0 0.0
        %1371 = vmatpush.msra.mxu0 0.0
        %1372 = vmatpush.msra.mxu0 %v1304
        %1373 = vmatpush.msra.mxu0 %v1301
        %1374 = vmatpush.msra.mxu0 %v1298
        %1375 = vmatpush.msra.mxu0 %v1295
        %1376 = vmatmul.f32.gmra.mxu0 %v1318
        %v1377 = vpop.f32.mrf.mxu0
        %v1378 = vadd.f32 0.0, %v1377
        %1379 = vdwg.mxu0
        %v1380 = vadd.f32 %v1255, %v1338
        %v1381 = vadd.f32 %v1256, %v1358
        %v1382 = vadd.f32 %v1257, %v1378
        %v1383 = vld [vmem:[%s2] sm:$0xff]
        %1385 = vset.pattern.permute.xlu0 0
        %1386 = vperm.xlu0 %1385, %v1383
        %v1387 = vpop.permute.xlu0 %1386
        %v1389 = vadd.f32 %v1380, %v1387
        %v1390 = vadd.f32 %v1381, %v1387
        %v1391 = vadd.f32 %v1382, %v1387
        %v1392 = vmax.f32 %v1389, 0.0
        %v1393 = vmax.f32 %v1390, 0.0
        %v1394 = vmax.f32 %v1391, 0.0
        %v1395 = vld [vmem:[%s3] sm:$0xff]
        %1397 = vset.pattern.permute.xlu0 0
        %1398 = vperm.xlu0 %1397, %v1395
        %v1399 = vpop.permute.xlu0 %1398
        %v1401 = vmul.f32 %v1392, %v1399
        %v1402 = vmul.f32 %v1393, %v1399
        %v1403 = vmul.f32 %v1394, %v1399
        %v1404 = vrot.slane %v1401, 4
        %v1405 = vadd.f32 %v1401, %v1404
        %v1406 = vrot.slane %v1405, 2
        %v1407 = vadd.f32 %v1405, %v1406
        %v1408 = vrot.slane %v1407, 1
        %v1409 = vadd.f32 %v1407, %v1408
        %v1410 = vrot.slane %v1402, 4
        %v1411 = vadd.f32 %v1402, %v1410
        %v1412 = vrot.slane %v1411, 2
        %v1413 = vadd.f32 %v1411, %v1412
        %v1414 = vrot.slane %v1413, 1
        %v1415 = vadd.f32 %v1413, %v1414
        %v1416 = vrot.slane %v1403, 4
        %v1417 = vadd.f32 %v1403, %v1416
        %v1418 = vrot.slane %v1417, 2
        %v1419 = vadd.f32 %v1417, %v1418
        %v1420 = vrot.slane %v1419, 1
        %v1421 = vadd.f32 %v1419, %v1420
        %v1422 = vld [vmem:[#allocation2] sm:$0x1]
        %1424 = vset.pattern.permute.xlu0 0
        %1425 = vperm.xlu0 %1424, %v1422
        %v1426 = vpop.permute.xlu0 %1425
        %v1428 = vperm.slane %v1426, 0
        %v1429 = vadd.f32 %v1409, %v1428
        %v1430 = vadd.f32 %v1415, %v1428
        %v1431 = vadd.f32 %v1421, %v1428
        %v1432 = vxor.u32 %v1429, 2147483648
        %v1433 = vxor.u32 %v1430, 2147483648
        %v1434 = vxor.u32 %v1431, 2147483648
        %v1435 = vmul.f32 %v1432, 1.442695
        %v1436 = vpow.pop %v1435
        %v1437 = vmul.f32 %v1433, 1.442695
        %v1438 = vpow.pop %v1437
        %v1439 = vmul.f32 %v1434, 1.442695
        %v1440 = vpow.pop %v1439
        %v1441 = vadd.f32 %v1436, 1.0
        %v1442 = vadd.f32 %v1438, 1.0
        %v1443 = vadd.f32 %v1440, 1.0
        %v1444 = vrcp.pop %v1441
        %v1445 = vmul.f32 %v1441, %v1444
        %v1446 = vsub.f32 1.0, %v1445
        %v1447 = vmul.f32 %v1444, %v1446
        %v1448 = vadd.f32 %v1444, %v1447
        %vm1449 = vweird.f32 %v1441
        %vm1450 = vweird.f32 %v1444
        %vm1451 = vmor %vm1449, %vm1450
        %v1452 = vsel %vm1451, %v1444, %v1448
        %v1453 = vand.u32 2147483647, %v1441
        %vm1454 = vcmp.eq.f32.partialorder %v1453, 8.507059e+37
        %v1455 = vand.u32 %v1441, 2147483648
        %v1456 = vor.u32 1.1754944e-38, %v1455
        %v1457 = vsel %vm1454, %v1456, %v1452
        %v1458 = vmul.f32 1.0, %v1457
        %v1459 = vrcp.pop %v1442
        %v1460 = vmul.f32 %v1442, %v1459
        %v1461 = vsub.f32 1.0, %v1460
        %v1462 = vmul.f32 %v1459, %v1461
        %v1463 = vadd.f32 %v1459, %v1462
        %vm1464 = vweird.f32 %v1442
        %vm1465 = vweird.f32 %v1459
        %vm1466 = vmor %vm1464, %vm1465
        %v1467 = vsel %vm1466, %v1459, %v1463
        %v1468 = vand.u32 2147483647, %v1442
        %vm1469 = vcmp.eq.f32.partialorder %v1468, 8.507059e+37
        %v1470 = vand.u32 %v1442, 2147483648
        %v1471 = vor.u32 1.1754944e-38, %v1470
        %v1472 = vsel %vm1469, %v1471, %v1467
        %v1473 = vmul.f32 1.0, %v1472
        %v1474 = vrcp.pop %v1443
        %v1475 = vmul.f32 %v1443, %v1474
        %v1476 = vsub.f32 1.0, %v1475
        %v1477 = vmul.f32 %v1474, %v1476
        %v1478 = vadd.f32 %v1474, %v1477
        %vm1479 = vweird.f32 %v1443
        %vm1480 = vweird.f32 %v1474
        %vm1481 = vmor %vm1479, %vm1480
        %v1482 = vsel %vm1481, %v1474, %v1478
        %v1483 = vand.u32 2147483647, %v1443
        %vm1484 = vcmp.eq.f32.partialorder %v1483, 8.507059e+37
        %v1485 = vand.u32 %v1443, 2147483648
        %v1486 = vor.u32 1.1754944e-38, %v1485
        %v1487 = vsel %vm1484, %v1486, %v1482
        %v1488 = vmul.f32 1.0, %v1487
        %v1492 = vrot.slane %v1473, 7
        %v1493 = vrot.slane %v1488, 6
        %vm1494 = vcmask 1040384
        %v1495 = vsel %vm1494, %v1458, %v1492
        %vm1496 = vcmask 1041408
        %v1497 = vsel %vm1496, %v1495, %v1493
        %v1499 = vlaneseq
        %vm1500 = vcmp.ge.s32.totalorder %v1499, 0
        %vm1501 = vcmp.lt.s32.totalorder %v1499, 384
        %vm1502 = vmand %vm1500, %vm1501
        %1503 = vst.msk [vmem:[%s275] sm:$0x7] %vm1502, %v1497
        %s1504 = smul.u32 3, %s18
        %p1505 = scmp.lt.s32.totalorder %s1504, 5
        %s1506 = scalar_select %p1505, %s1504, 5
        %s1507 = scalar_lea.vmem %s5, %s1506
        // Predicated region
        $region64: #{proj_layers_forward.1} parent=58 // pred_check
          %p1508 = pneg %p146
        $region65: #{proj_layers_forward.1} parent=58 // pred_check_branch
          %1510 = sbr.rel (%p1508) target = $region67
        $region66: #{proj_layers_forward.1} parent=58 // pred_region
          %s1511 = smul.u32 3, %s18
        $region67: #{proj_layers_forward.1} parent=58 // pred_fallthru
          _
      $region59: #{proj_layers_forward.1} parent=5 // pred_fallthru
        _
      %p1512 = scmp.le.s32.totalorder 2, %s13
      // Predicated region
      $region68: #{proj_layers_forward.1} parent=5 // pred_check
        %p1513 = pneg %p1512
      $region69: #{proj_layers_forward.1} parent=5 // pred_check_branch
        %1515 = sbr.rel (%p1513) target = $region71
      $region70: #{proj_layers_forward.1} parent=5 // pred_region
        %s1516 = ssub.s32 %s13, 2
        // Predicated region
        $region72: #{proj_layers_forward.1} parent=70 // pred_check
          %p1517 = pneg %p152
        $region73: #{proj_layers_forward.1} parent=70 // pred_check_branch
          %1519 = sbr.rel (%p1517) target = $region75
        $region74: #{proj_layers_forward.1} parent=70 // pred_region
          %s1520 = smul.u32 3, %s19
          %p1521 = scmp.lt.s32.totalorder %s1520, 5
          %s1522 = scalar_select %p1521, %s1520, 5
          %s1523 = scalar_lea.vmem %s5, %s1522
        $region75: #{proj_layers_forward.1} parent=70 // pred_fallthru
          _
      $region71: #{proj_layers_forward.1} parent=5 // pred_fallthru
        _
    $region6: #{proj_layers_forward.1} parent=1 // loop_footer
      %s17 = sadd.s32 1, %s13
    $region7: #{proj_layers_forward.1} parent=1 // loop_footer_branch
      %12 = sbr.rel target = $region3
    $region8: #{proj_layers_forward.1} parent=1 // loop_exit
      _

</llo_original>
